<compile_context>
chip_gen: v7x
topology: tpu7x:2x2x1
jax: 0.10.0
libtpu: 0.0.40
codegen_flags: <defaults>
</compile_context>

<pallas_src>
import math

import jax
import jax.numpy as jnp
from jax.experimental import pallas as pl
from jax.experimental.pallas import tpu as pltpu

# ---- static configuration --------------------------------------------------
NUM_CH = 4       # num_channels (dataset_shape[1])
T = 16           # resolution = progression_scale ** initial_size
CH_IN = 32       # nf(1)
CH_OUT = 64      # nf(0)
KSIZE = 3        # kernel_size
GROUP_SIZE = 4   # MinibatchStddev group size (== samples per grid step)
ACT_ALPHA = 0.2  # leaky-relu slope

assert GROUP_SIZE <= 8  # one (8,128) output tile per group

# aux parameter tile: one [32, 128] f32 VMEM input carrying every small param.
_AUX_ROWS = 32
_AUX_B1, _AUX_B2, _AUX_B3, _AUX_WL, _AUX_BL = 0, 1, 2, 3, 4
_AUX_W1 = 8                   # rows 8..8+NUM_CH-1 : fromRGB weight [C, C1]
_AUX_SMB = 16                 # rows 16..16+T-1    : mbstd fold table s_mb[T, C1]


def _lrelu(v, alpha=ACT_ALPHA):
    return jnp.where(v >= 0, v, alpha * v)


# ---- Pallas kernel: one MinibatchStddev group (GROUP_SIZE samples) per step -
def _discriminator_kernel(x_ref, w2_ref, w3_ref, aux_ref, out_ref, lhs_ref):
    f32 = jnp.float32
    bf16 = jnp.bfloat16
    g, t, c = x_ref.shape            # (GROUP_SIZE, T, NUM_CH)
    c1 = w2_ref.shape[-1]            # 32
    c2 = w3_ref.shape[-1]            # 64

    # --- unpack small params from the single aux tile (static ref slices) ---
    b1 = aux_ref[_AUX_B1:_AUX_B1 + 1, 0:c1]                # [1, C1]
    b2 = aux_ref[_AUX_B2:_AUX_B2 + 1, 0:c1]                # [1, C1]
    b3 = aux_ref[_AUX_B3:_AUX_B3 + 1, 0:c2]                # [1, C2]
    wl = aux_ref[_AUX_WL:_AUX_WL + 1, 0:c2]                # [1, C2]
    bl = aux_ref[_AUX_BL:_AUX_BL + 1, 0:1]                 # [1, 1]
    w1 = aux_ref[_AUX_W1:_AUX_W1 + c, 0:c1]                # [C, C1]
    s_mb = aux_ref[_AUX_SMB:_AUX_SMB + t, 0:c1]            # [T, C1]

    # --- fromRGB: equalized 1x1 conv + lrelu (f32; K=4, keep full precision) -
    y1 = _lrelu(jnp.dot(x_ref[...].reshape(g * t, c), w1,
                        preferred_element_type=f32) + b1)          # [G*T, C1]
    y1_3d = y1.reshape(g, t, c1)

    # --- MinibatchStddev over the G samples of this grid step (m == 1) ------
    mu = jnp.mean(y1_3d, axis=0, keepdims=True)
    var = jnp.mean((y1_3d - mu) ** 2, axis=0)                      # [T, C1]
    mb = jnp.mean(jnp.sqrt(var + 1e-8))                            # scalar

    # --- conv k=3 'same': build the im2col lhs with three lane-offset stores
    #     of y1 at time-shifted row offsets into one [G, T+2, 3*C1] scratch,
    #     then one contiguous read of rows 1..T.  Row 1 of the prev-tap lanes
    #     and row T of the next-tap lanes are the 'same'-padding zeros and are
    #     rewritten every step (no persistent-scratch assumptions). -----------
    lhs_ref[:, 2:2 + t, 0:c1] = y1_3d                  # tap @ t-1
    lhs_ref[:, 1:1 + t, c1:2 * c1] = y1_3d             # tap @ t
    lhs_ref[:, 0:t, 2 * c1:3 * c1] = y1_3d             # tap @ t+1
    lhs_ref[:, 1:2, 0:c1] = jnp.zeros((g, 1, c1), f32)               # t = 0
    lhs_ref[:, t:t + 1, 2 * c1:3 * c1] = jnp.zeros((g, 1, c1), f32)  # t = T-1
    lhs = lhs_ref[:, 1:1 + t, :].reshape(g * t, 3 * c1).astype(bf16)
    y2 = jnp.dot(lhs, w2_ref[...],
                 preferred_element_type=f32).reshape(g, t, c1)

    # mbstd channel is constant per group -> folded as an edge-corrected
    # per-timestep bias (s_mb precomputed host-side).
    y2 = _lrelu(y2 + b2.reshape(1, 1, c1) + mb * s_mb[None])        # [G, T, C1]

    # --- conv kernel=T, pad=0 (collapses the time axis): one bf16 matmul -----
    y3 = _lrelu(jnp.dot(y2.reshape(g, t * c1).astype(bf16), w3_ref[...],
                        preferred_element_type=f32) + b3)           # [G, C2]

    # --- linear 1x1 head (act_alpha=-1 -> no activation): VPU mul + reduce ---
    o = jnp.sum(y3 * wl, axis=-1, keepdims=True) + bl               # [G, 1]

    # --- epilogue: two ref-slice stores into the lane-dense (8,128) out tile.
    #     Rows G..7 / lanes C2+1..127 are never read by the wrapper. ----------
    out_ref[0:g, 0:c2] = y3
    out_ref[0:g, c2:c2 + 1] = o


# ---- parameter construction (deterministic, PyTorch Conv1d layout) ---------
def make_torch_params(key):
    """PyTorch-layout (O, I, W) params.  The two big conv weights are rounded
    to bf16-representable values (the kernel stores them as bf16; the f32
    reference uses the identical values)."""
    ks = jax.random.split(key, 8)

    def nrm(kk, shape):
        return jax.random.normal(kk, shape, jnp.float32)

    def q_bf16(w):
        return w.astype(jnp.bfloat16).astype(jnp.float32)

    # equalized lr: the runtime he-scale sqrt(2/fan_in) is folded into weights.
    s1 = math.sqrt(2.0 / (NUM_CH * 1))
    w1 = nrm(ks[0], (CH_IN, NUM_CH, 1)) * s1                 # fromRGB (O,I,W)
    b1 = 0.1 * nrm(ks[1], (CH_IN,))
    s2 = math.sqrt(2.0 / ((CH_IN + 1) * KSIZE))
    w2 = q_bf16(nrm(ks[2], (CH_IN, CH_IN + 1, KSIZE)) * s2)  # conv k=3
    b2 = 0.1 * nrm(ks[3], (CH_IN,))
    s3 = math.sqrt(2.0 / (CH_IN * T))
    w3 = q_bf16(nrm(ks[4], (CH_OUT, CH_IN, T)) * s3)         # conv k=T, pad=0
    b3 = 0.1 * nrm(ks[5], (CH_OUT,))
    sl = math.sqrt(2.0 / (CH_OUT * 1))
    wl = nrm(ks[6], (1, CH_OUT, 1)) * sl                     # linear 1x1
    bl = 0.1 * nrm(ks[7], (1,))
    return (w1, b1, w2, b2, w3, b3, wl, bl)


def to_kernel_params(p):
    """Pack PyTorch (O, I, W) conv weights into fused-matmul / aux-tile form."""
    w1, b1, w2, b2, w3, b3, wl, bl = p
    # fused conv2 weight (real 32 channels): rows = [tap@t-1 | tap@t | tap@t+1]
    kw2 = jnp.concatenate([w2[:, :CH_IN, k].T for k in range(KSIZE)],
                          axis=0).astype(jnp.bfloat16)               # [3*C1, C1]
    # conv3 (kernel=T) as a single matmul: row index = t*C_in + c_in
    kw3 = jnp.transpose(w3, (2, 1, 0)).reshape(T * CH_IN, CH_OUT)
    kw3 = kw3.astype(jnp.bfloat16)                                   # [T*C1, C2]
    # mbstd-channel scale table, pre-summed with zero-padding edge corrections.
    wmb = w2[:, CH_IN, :]                                            # [C1, K]
    s_mb = jnp.tile((wmb[:, 0] + wmb[:, 1] + wmb[:, 2])[None, :], (T, 1))
    s_mb = s_mb.at[0].set(wmb[:, 1] + wmb[:, 2])       # t = 0   (t-1 tap padded)
    s_mb = s_mb.at[T - 1].set(wmb[:, 0] + wmb[:, 1])   # t = T-1 (t+1 tap padded)
    aux = jnp.zeros((_AUX_ROWS, 128), jnp.float32)
    aux = aux.at[_AUX_B1, :CH_IN].set(b1)
    aux = aux.at[_AUX_B2, :CH_IN].set(b2)
    aux = aux.at[_AUX_B3, :CH_OUT].set(b3)
    aux = aux.at[_AUX_WL, :CH_OUT].set(wl[0, :, 0])
    aux = aux.at[_AUX_BL, 0].set(bl[0])
    aux = aux.at[_AUX_W1:_AUX_W1 + NUM_CH, :CH_IN].set(w1[:, :, 0].T)
    aux = aux.at[_AUX_SMB:_AUX_SMB + T, :CH_IN].set(s_mb)
    return (kw2, kw3, aux)


# ---- wrapper ----------------------------------------------------------------
@jax.jit
def discriminator_forward(x, kparams):
    """x: [N, C, T] float32 (PyTorch NCL), N % GROUP_SIZE == 0.
    Returns (o: [N], h: [N, CH_OUT, 1])."""
    kw2, kw3, aux = kparams
    n = x.shape[0]
    assert n % GROUP_SIZE == 0  # TODO(synk): partial last group not supported
    m = n // GROUP_SIZE                      # number of mbstd groups = grid size
    # NCL -> NTC (channels on lanes); then split the batch into ProGAN strided
    # groups: batch b -> (member j = b // m, group i = b % m).  Pure reshape.
    x_r = jnp.transpose(x, (0, 2, 1)).reshape(GROUP_SIZE, m, T, NUM_CH)
    out = pl.pallas_call(
        _discriminator_kernel,
        grid=(m,),
        out_shape=jax.ShapeDtypeStruct((8, m * 128), jnp.float32),
        in_specs=[
            # per-group activations: new block each step (pipelined DMA)
            pl.BlockSpec((GROUP_SIZE, None, T, NUM_CH), lambda i: (0, i, 0, 0)),
            # weights: constant index_map -> VMEM-resident across all steps
            pl.BlockSpec((KSIZE * CH_IN, CH_IN), lambda i: (0, 0)),
            pl.BlockSpec((T * CH_IN, CH_OUT), lambda i: (0, 0)),
            pl.BlockSpec((_AUX_ROWS, 128), lambda i: (0, 0)),
        ],
        out_specs=pl.BlockSpec((8, 128), lambda i: (0, i)),
        scratch_shapes=[pltpu.VMEM((GROUP_SIZE, T + 2, KSIZE * CH_IN),
                                   jnp.float32)],
        compiler_params=pltpu.CompilerParams(
            dimension_semantics=("parallel",)),
    )(x_r, kw2, kw3, aux)
    out3 = out[:GROUP_SIZE].reshape(GROUP_SIZE, m, 128)  # (member, group, lane)
    h = out3[:, :, :CH_OUT].reshape(n, CH_OUT)[:, :, None]   # NCL: [N, C2, 1]
    o = out3[:, :, CH_OUT].reshape(n)
    return o, h


# ---- pure-JAX reference (PyTorch NCL layout, lax.conv at full precision) ----
def reference_forward(x, p):
    w1, b1, w2, b2, w3, b3, wl, bl = p
    hi = jax.lax.Precision.HIGHEST

    def conv1d(h, w, b, pad):
        out = jax.lax.conv_general_dilated(
            h, w, window_strides=(1,), padding=[(pad, pad)],
            dimension_numbers=('NCH', 'OIH', 'NCH'), precision=hi)
        return out + b[None, :, None]

    h = _lrelu(conv1d(x, w1, b1, 0))                          # fromRGB
    n, c, t = h.shape
    g = min(GROUP_SIZE, n)
    m = n // g
    y = h.reshape(g, m, c, t)
    y = y - jnp.mean(y, axis=0, keepdims=True)
    y = jnp.mean(y ** 2, axis=0)
    y = jnp.sqrt(y + 1e-8)
    y = jnp.mean(y, axis=(1, 2), keepdims=True)               # [M,1,1]
    y = jnp.tile(y, (g, 1, t))                                # [N,1,T]
    h = jnp.concatenate([h, y], axis=1)                       # mbstd channel
    h = _lrelu(conv1d(h, w2, b2, KSIZE // 2))
    h = _lrelu(conv1d(h, w3, b3, 0))                          # [N, C2, 1]
    o = conv1d(h, wl, bl, 0)                                  # [N, 1, 1]
    o = jnp.squeeze(jnp.mean(o, axis=2))
    return o, h


if __name__ == "__main__":
    N = 16                                   # batch -> 4 mbstd groups, grid=(4,)
    key = jax.random.PRNGKey(0)
    kx, kp = jax.random.split(key)
    x = jax.random.normal(kx, (N, NUM_CH, T), jnp.float32)

    torch_params = make_torch_params(kp)
    kernel_params = to_kernel_params(torch_params)

    o, h = discriminator_forward(x, kernel_params)
    o, h = jax.block_until_ready((o, h))

    o_ref, h_ref = reference_forward(x, torch_params)
    assert o.shape == (N,) and h.shape == (N, CH_OUT, 1)
    # bf16 matmuls in the kernel vs f32 reference -> loosened tolerance.
    assert jnp.allclose(o, o_ref, rtol=2e-2, atol=2e-2), \
        float(jnp.max(jnp.abs(o - o_ref)))
    assert jnp.allclose(h, h_ref, rtol=2e-2, atol=2e-2), \
        float(jnp.max(jnp.abs(h - h_ref)))
    print("KERNEL_OK")
</pallas_src>

<mosaic_0001>
module attributes {stable_mosaic.version = 11 : i64} {
  func.func @_discriminator_kernel(%arg0: i32, %arg1: memref<4x1x16x4xf32, #tpu.memory_space<vmem>>, %arg2: memref<96x32xbf16, #tpu.memory_space<vmem>>, %arg3: memref<512x64xbf16, #tpu.memory_space<vmem>>, %arg4: memref<32x128xf32, #tpu.memory_space<vmem>>, %arg5: memref<8x128xf32, #tpu.memory_space<vmem>>, %arg6: memref<4x18x96xf32, #tpu.memory_space<vmem>>) attributes {dimension_semantics = [#tpu.dimension_semantics<parallel>], iteration_bounds = array<i64: 4>, scalar_prefetch = 0 : i64, scratch_operands = 1 : i64, tpu.core_type = #tpu.core_type<tc>, window_params = [{transform_indices = @transform_0, window_bounds = array<i64: 4, 1, 16, 4>}, {pipeline_mode = #tpu.pipeline_mode<synchronous>, transform_indices = @transform_1, window_bounds = array<i64: 96, 32>}, {pipeline_mode = #tpu.pipeline_mode<synchronous>, transform_indices = @transform_2, window_bounds = array<i64: 512, 64>}, {pipeline_mode = #tpu.pipeline_mode<synchronous>, transform_indices = @transform_3, window_bounds = array<i64: 32, 128>}, {transform_indices = @transform_4, window_bounds = array<i64: 8, 128>}]} {
    %c0 = arith.constant 0 : index
    %c0_0 = arith.constant 0 : index
    %0 = vector.load %arg4[%c0, %c0_0] : memref<32x128xf32, #tpu.memory_space<vmem>>, vector<1x32xf32>
    %c1 = arith.constant 1 : index
    %c0_1 = arith.constant 0 : index
    %1 = vector.load %arg4[%c1, %c0_1] : memref<32x128xf32, #tpu.memory_space<vmem>>, vector<1x32xf32>
    %c2 = arith.constant 2 : index
    %c0_2 = arith.constant 0 : index
    %2 = vector.load %arg4[%c2, %c0_2] : memref<32x128xf32, #tpu.memory_space<vmem>>, vector<1x64xf32>
    %c3 = arith.constant 3 : index
    %c0_3 = arith.constant 0 : index
    %3 = vector.load %arg4[%c3, %c0_3] : memref<32x128xf32, #tpu.memory_space<vmem>>, vector<1x64xf32>
    %c4 = arith.constant 4 : index
    %c0_4 = arith.constant 0 : index
    %4 = vector.load %arg4[%c4, %c0_4] : memref<32x128xf32, #tpu.memory_space<vmem>>, vector<1x1xf32>
    %c8 = arith.constant 8 : index
    %c0_5 = arith.constant 0 : index
    %5 = vector.load %arg4[%c8, %c0_5] : memref<32x128xf32, #tpu.memory_space<vmem>>, vector<4x32xf32>
    %c16 = arith.constant 16 : index
    %c0_6 = arith.constant 0 : index
    %6 = vector.load %arg4[%c16, %c0_6] : memref<32x128xf32, #tpu.memory_space<vmem>>, vector<16x32xf32>
    %c0_7 = arith.constant 0 : index
    %c0_8 = arith.constant 0 : index
    %c0_9 = arith.constant 0 : index
    %c0_10 = arith.constant 0 : index
    %7 = vector.load %arg1[%c0_7, %c0_8, %c0_9, %c0_10] : memref<4x1x16x4xf32, #tpu.memory_space<vmem>>, vector<4x1x16x4xf32>
    %8 = vector.shape_cast %7 : vector<4x1x16x4xf32> to vector<4x16x4xf32>
    %9 = vector.shape_cast %8 : vector<4x16x4xf32> to vector<64x4xf32>
    %cst = arith.constant dense<0.000000e+00> : vector<64x32xf32>
    %10 = tpu.matmul %9, %5, %cst {dimension_numbers = #tpu.dot_dimension_numbers<[1], [0], [0], [1], [0, 0, 1, 1], [], []>} : vector<64x4xf32>, vector<4x32xf32>, vector<64x32xf32> -> vector<64x32xf32>
    %11 = vector.broadcast %0 : vector<1x32xf32> to vector<64x32xf32>
    %12 = arith.addf %10, %11 : vector<64x32xf32>
    %cst_11 = arith.constant 0.000000e+00 : f32
    %13 = vector.broadcast %cst_11 : f32 to vector<64x32xf32>
    %14 = arith.cmpf oge, %12, %13 : vector<64x32xf32>
    %cst_12 = arith.constant 2.000000e-01 : f32
    %15 = vector.broadcast %cst_12 : f32 to vector<64x32xf32>
    %16 = arith.mulf %15, %12 : vector<64x32xf32>
    %17 = arith.select %14, %12, %16 : vector<64x32xi1>, vector<64x32xf32>
    %18 = vector.shape_cast %17 : vector<64x32xf32> to vector<4x16x32xf32>
    %cst_13 = arith.constant dense<0.000000e+00> : vector<16x32xf32>
    %19 = vector.multi_reduction <add>, %18, %cst_13 [0] : vector<4x16x32xf32> to vector<16x32xf32>
    %20 = vector.shape_cast %19 : vector<16x32xf32> to vector<1x16x32xf32>
    %cst_14 = arith.constant 4.000000e+00 : f32
    %21 = vector.broadcast %cst_14 : f32 to vector<1x16x32xf32>
    %22 = arith.divf %20, %21 : vector<1x16x32xf32>
    %23 = vector.broadcast %22 : vector<1x16x32xf32> to vector<4x16x32xf32>
    %24 = arith.subf %18, %23 : vector<4x16x32xf32>
    %25 = arith.mulf %24, %24 : vector<4x16x32xf32>
    %cst_15 = arith.constant dense<0.000000e+00> : vector<16x32xf32>
    %26 = vector.multi_reduction <add>, %25, %cst_15 [0] : vector<4x16x32xf32> to vector<16x32xf32>
    %cst_16 = arith.constant 4.000000e+00 : f32
    %27 = vector.broadcast %cst_16 : f32 to vector<16x32xf32>
    %28 = arith.divf %26, %27 : vector<16x32xf32>
    %cst_17 = arith.constant 9.99999993E-9 : f32
    %29 = vector.broadcast %cst_17 : f32 to vector<16x32xf32>
    %30 = arith.addf %28, %29 : vector<16x32xf32>
    %31 = math.sqrt %30 : vector<16x32xf32>
    %32 = vector.shape_cast %31 : vector<16x32xf32> to vector<1x16x32xf32>
    %cst_18 = arith.constant dense<0.000000e+00> : vector<1xf32>
    %33 = vector.multi_reduction <add>, %32, %cst_18 [1, 2] : vector<1x16x32xf32> to vector<1xf32>
    %34 = vector.shape_cast %33 : vector<1xf32> to vector<1x1x1xf32>
    %35 = vector.extract %34[0, 0, 0] : f32 from vector<1x1x1xf32>
    %cst_19 = arith.constant 5.120000e+02 : f32
    %36 = arith.divf %35, %cst_19 : f32
    %c0_20 = arith.constant 0 : index
    %c2_21 = arith.constant 2 : index
    %c0_22 = arith.constant 0 : index
    %37 = vector.load %arg6[%c0_20, %c2_21, %c0_22] : memref<4x18x96xf32, #tpu.memory_space<vmem>>, vector<4x16x32xf32>
    tpu.vector_store %arg6[%c0_20, %c2_21, %c0_22], %18 {strides = array<i32>} : memref<4x18x96xf32, #tpu.memory_space<vmem>>, vector<4x16x32xf32>,
    %c0_23 = arith.constant 0 : index
    %c1_24 = arith.constant 1 : index
    %c32 = arith.constant 32 : index
    %38 = vector.load %arg6[%c0_23, %c1_24, %c32] : memref<4x18x96xf32, #tpu.memory_space<vmem>>, vector<4x16x32xf32>
    tpu.vector_store %arg6[%c0_23, %c1_24, %c32], %18 {strides = array<i32>} : memref<4x18x96xf32, #tpu.memory_space<vmem>>, vector<4x16x32xf32>,
    %c0_25 = arith.constant 0 : index
    %c0_26 = arith.constant 0 : index
    %c64 = arith.constant 64 : index
    %39 = vector.load %arg6[%c0_25, %c0_26, %c64] : memref<4x18x96xf32, #tpu.memory_space<vmem>>, vector<4x16x32xf32>
    tpu.vector_store %arg6[%c0_25, %c0_26, %c64], %18 {strides = array<i32>} : memref<4x18x96xf32, #tpu.memory_space<vmem>>, vector<4x16x32xf32>,
    %cst_27 = arith.constant 0.000000e+00 : f32
    %40 = vector.broadcast %cst_27 : f32 to vector<4x1x32xf32>
    %c0_28 = arith.constant 0 : index
    %c1_29 = arith.constant 1 : index
    %c0_30 = arith.constant 0 : index
    %41 = vector.load %arg6[%c0_28, %c1_29, %c0_30] : memref<4x18x96xf32, #tpu.memory_space<vmem>>, vector<4x1x32xf32>
    tpu.vector_store %arg6[%c0_28, %c1_29, %c0_30], %40 {strides = array<i32>} : memref<4x18x96xf32, #tpu.memory_space<vmem>>, vector<4x1x32xf32>,
    %cst_31 = arith.constant 0.000000e+00 : f32
    %42 = vector.broadcast %cst_31 : f32 to vector<4x1x32xf32>
    %c0_32 = arith.constant 0 : index
    %c16_33 = arith.constant 16 : index
    %c64_34 = arith.constant 64 : index
    %43 = vector.load %arg6[%c0_32, %c16_33, %c64_34] : memref<4x18x96xf32, #tpu.memory_space<vmem>>, vector<4x1x32xf32>
    tpu.vector_store %arg6[%c0_32, %c16_33, %c64_34], %42 {strides = array<i32>} : memref<4x18x96xf32, #tpu.memory_space<vmem>>, vector<4x1x32xf32>,
    %c0_35 = arith.constant 0 : index
    %c1_36 = arith.constant 1 : index
    %c0_37 = arith.constant 0 : index
    %44 = vector.load %arg6[%c0_35, %c1_36, %c0_37] : memref<4x18x96xf32, #tpu.memory_space<vmem>>, vector<4x16x96xf32>
    %45 = vector.shape_cast %44 : vector<4x16x96xf32> to vector<64x96xf32>
    %46 = arith.truncf %45 : vector<64x96xf32> to vector<64x96xbf16>
    %c0_38 = arith.constant 0 : index
    %c0_39 = arith.constant 0 : index
    %47 = vector.load %arg2[%c0_38, %c0_39] : memref<96x32xbf16, #tpu.memory_space<vmem>>, vector<96x32xbf16>
    %cst_40 = arith.constant dense<0.000000e+00> : vector<64x32xf32>
    %48 = tpu.matmul %46, %47, %cst_40 {dimension_numbers = #tpu.dot_dimension_numbers<[1], [0], [0], [1], [0, 0, 1, 1], [], []>} : vector<64x96xbf16>, vector<96x32xbf16>, vector<64x32xf32> -> vector<64x32xf32>
    %49 = vector.shape_cast %48 : vector<64x32xf32> to vector<4x16x32xf32>
    %50 = vector.shape_cast %1 : vector<1x32xf32> to vector<1x1x32xf32>
    %51 = vector.broadcast %50 : vector<1x1x32xf32> to vector<4x16x32xf32>
    %52 = arith.addf %49, %51 : vector<4x16x32xf32>
    %53 = vector.shape_cast %6 : vector<16x32xf32> to vector<1x16x32xf32>
    %54 = vector.broadcast %36 : f32 to vector<1x16x32xf32>
    %55 = arith.mulf %54, %53 : vector<1x16x32xf32>
    %56 = vector.broadcast %55 : vector<1x16x32xf32> to vector<4x16x32xf32>
    %57 = arith.addf %52, %56 : vector<4x16x32xf32>
    %cst_41 = arith.constant 0.000000e+00 : f32
    %58 = vector.broadcast %cst_41 : f32 to vector<4x16x32xf32>
    %59 = arith.cmpf oge, %57, %58 : vector<4x16x32xf32>
    %cst_42 = arith.constant 2.000000e-01 : f32
    %60 = vector.broadcast %cst_42 : f32 to vector<4x16x32xf32>
    %61 = arith.mulf %60, %57 : vector<4x16x32xf32>
    %62 = arith.select %59, %57, %61 : vector<4x16x32xi1>, vector<4x16x32xf32>
    %63 = vector.shape_cast %62 : vector<4x16x32xf32> to vector<4x512xf32>
    %64 = arith.truncf %63 : vector<4x512xf32> to vector<4x512xbf16>
    %c0_43 = arith.constant 0 : index
    %c0_44 = arith.constant 0 : index
    %65 = vector.load %arg3[%c0_43, %c0_44] : memref<512x64xbf16, #tpu.memory_space<vmem>>, vector<512x64xbf16>
    %cst_45 = arith.constant dense<0.000000e+00> : vector<4x64xf32>
    %66 = tpu.matmul %64, %65, %cst_45 {dimension_numbers = #tpu.dot_dimension_numbers<[1], [0], [0], [1], [0, 0, 1, 1], [], []>} : vector<4x512xbf16>, vector<512x64xbf16>, vector<4x64xf32> -> vector<4x64xf32>
    %67 = vector.broadcast %2 : vector<1x64xf32> to vector<4x64xf32>
    %68 = arith.addf %66, %67 : vector<4x64xf32>
    %cst_46 = arith.constant 0.000000e+00 : f32
    %69 = vector.broadcast %cst_46 : f32 to vector<4x64xf32>
    %70 = arith.cmpf oge, %68, %69 : vector<4x64xf32>
    %cst_47 = arith.constant 2.000000e-01 : f32
    %71 = vector.broadcast %cst_47 : f32 to vector<4x64xf32>
    %72 = arith.mulf %71, %68 : vector<4x64xf32>
    %73 = arith.select %70, %68, %72 : vector<4x64xi1>, vector<4x64xf32>
    %74 = vector.broadcast %3 : vector<1x64xf32> to vector<4x64xf32>
    %75 = arith.mulf %73, %74 : vector<4x64xf32>
    %cst_48 = arith.constant dense<0.000000e+00> : vector<4xf32>
    %76 = vector.multi_reduction <add>, %75, %cst_48 [1] : vector<4x64xf32> to vector<4xf32>
    %77 = vector.shape_cast %76 : vector<4xf32> to vector<4x1xf32>
    %78 = vector.broadcast %4 : vector<1x1xf32> to vector<4x1xf32>
    %79 = arith.addf %77, %78 : vector<4x1xf32>
    %c0_49 = arith.constant 0 : index
    %c0_50 = arith.constant 0 : index
    %80 = vector.load %arg5[%c0_49, %c0_50] : memref<8x128xf32, #tpu.memory_space<vmem>>, vector<4x64xf32>
    tpu.vector_store %arg5[%c0_49, %c0_50], %73 {strides = array<i32>} : memref<8x128xf32, #tpu.memory_space<vmem>>, vector<4x64xf32>,
    %c0_51 = arith.constant 0 : index
    %c64_52 = arith.constant 64 : index
    %81 = vector.load %arg5[%c0_51, %c64_52] : memref<8x128xf32, #tpu.memory_space<vmem>>, vector<4x1xf32>
    tpu.vector_store %arg5[%c0_51, %c64_52], %79 {strides = array<i32>} : memref<8x128xf32, #tpu.memory_space<vmem>>, vector<4x1xf32>,
    return
  }
  func.func @transform_0(%arg0: i32) -> (i32, i32, i32, i32) {
    %c0_i32 = arith.constant 0 : i32
    %c0_i32_0 = arith.constant 0 : i32
    %c0_i32_1 = arith.constant 0 : i32
    %c0_i32_2 = arith.constant 0 : i32
    return %c0_i32, %arg0, %c0_i32_0, %c0_i32_1 : i32, i32, i32, i32
  }
  func.func @transform_1(%arg0: i32) -> (i32, i32) {
    %c0_i32 = arith.constant 0 : i32
    %c0_i32_0 = arith.constant 0 : i32
    %c0_i32_1 = arith.constant 0 : i32
    return %c0_i32, %c0_i32_0 : i32, i32
  }
  func.func @transform_2(%arg0: i32) -> (i32, i32) {
    %c0_i32 = arith.constant 0 : i32
    %c0_i32_0 = arith.constant 0 : i32
    %c0_i32_1 = arith.constant 0 : i32
    return %c0_i32, %c0_i32_0 : i32, i32
  }
  func.func @transform_3(%arg0: i32) -> (i32, i32) {
    %c0_i32 = arith.constant 0 : i32
    %c0_i32_0 = arith.constant 0 : i32
    %c0_i32_1 = arith.constant 0 : i32
    return %c0_i32, %c0_i32_0 : i32, i32
  }
  func.func @transform_4(%arg0: i32) -> (i32, i32) {
    %c0_i32 = arith.constant 0 : i32
    %c0_i32_0 = arith.constant 0 : i32
    return %c0_i32, %arg0 : i32, i32
  }
}

</mosaic_0001>

<llo_original>
// kernel: squeeze.1
$region0: #{squeeze.1}
  %s0 = inlined_call_operand.vmem [shape: f32[4,4], index: 0, kind: input, shape index: {}]
  %s1 = inlined_call_operand.hbm [shape: f32[16], index: 1, kind: output, shape index: {}]
  $region1: #{squeeze.1} parent=0
    #allocation0 [shape = 'u8[512]{0}', space=vmem, size = 0x400, scoped, tag = 'operand span for operand 1']
    #allocation1 [shape = 's32[1]{0}', space=sflag, size = 0x4, scoped, tag = 'scoped memory for squeeze.1']
    #allocation2 [shape = 'u8[4096]{0}', space=vmem, size = 0x1000, scoped, tag = 'scoped mem for output reshape']
    #allocation3 [shape = 'u8[4096]{0}', space=vmem, size = 0x1000, scoped, tag = 'scoped mem for input reshape']
    %2 = vsyncpa [#allocation1], 0
    %s4 = sshllo.u32 0, 4
    %v5 = vld [vmem:[%s0] sm:%s4]
    %6 = vst [vmem:[#allocation3] sm:%s4] %v5
    %v7 = vld [vmem:[#allocation3] sm:$0x1]
    %vm8 = vcmask 31744
    %9 = vst.msk [vmem:[#allocation2] sm:$0x1] %vm8, %v7
    %s10 = scalar_lea.vmem [#allocation3], 3
    %v11 = vld [vmem:[%s10] sm:$0x1]
    %12 = vrot.lane.b32.xlu0 %v11, 12
    %v13 = vpop.permute.xlu0 %12
    %vm14 = vcmask 130144
    %15 = vst.msk [vmem:[#allocation2] sm:$0x1] %vm14, %v13
    %s16 = scalar_lea.vmem [#allocation3], 2
    %v17 = vld [vmem:[%s16] sm:$0x1]
    %18 = vrot.lane.b32.xlu0 %v17, 8
    %v19 = vpop.permute.xlu0 %18
    %vm20 = vcmask 97344
    %21 = vst.msk [vmem:[#allocation2] sm:$0x1] %vm20, %v19
    %s22 = scalar_lea.vmem [#allocation3], 1
    %v23 = vld [vmem:[%s22] sm:$0x1]
    %24 = vrot.lane.b32.xlu0 %v23, 4
    %v25 = vpop.permute.xlu0 %24
    %vm26 = vcmask 64544
    %27 = vst.msk [vmem:[#allocation2] sm:$0x1] %vm26, %v25
    %s29 = sshllo.u32 0, 1
    %v31 = vld [vmem:[#allocation2] sm:%s29]
    %s32 = sshllo.u32 0, 1
    %33 = vst [vmem:[#allocation0] sm:%s32] %v31
    %s35 = ssub.s32 16, 16
    %36 = vsyncadd [#allocation1], %s35
    %s38 = sshll.u32 [#allocation0], 4
    %s39 = int_to_ptr.vmem [resolvable:$true] %s38
    %41 = dma.vmem_to_hbm [thread:$0]  %s39, 16, %s1, [#allocation1]
    %42 = dma.done [#allocation1], 16
    %43 = vsyncpa [#allocation1], 1

// kernel: discriminator_forward.1
$region0: #{discriminator_forward.1}
  #allocation0 [shape = 'u32[]', space=smem, size = 0x4, offset = 0x4, fixed_abs, tag = 'smem constant byte address 0x4 - core index']
  #allocation1 [shape = 'u32[144,128]{1,0:T(1,128)}', space=vmem, size = 0x12000, scoped, tag = 'internal scratch']
  #allocation2 [shape = 'f32[4,18,96]{2,1,0:T(8,128)}', space=vmem, size = 0xc000, scoped, tag = 'scratch operand']
  %s0 = inlined_call_operand.vmem [shape: f32[4,4,16,4], index: 0, kind: input, shape index: {}]
  %s1 = inlined_call_operand.vmem [shape: bf16[96,32], index: 1, kind: input, shape index: {}]
  %s2 = inlined_call_operand.vmem [shape: bf16[512,64], index: 2, kind: input, shape index: {}]
  %s3 = inlined_call_operand.vmem [shape: f32[32,128], index: 3, kind: input, shape index: {}]
  %s4 = inlined_call_operand.vmem [shape: f32[8,512], index: 4, kind: output, shape index: {}]
  %s5 = sld [smem:[#allocation0]]
  $region87: #{discriminator_forward.1} parent=0
    _
  %s7 = ssub.s32 1, %s5
  %s8 = scalar_select 0, %s7, %s5
  $region1: #{discriminator_forward.1} parent=0
    #allocation3 [shape = 'u8[65536]{0}', space=vmem, size = 0x10000, scoped, tag = 'input window, operand 0']
    loop: start=0, step=1, limit=6
    $region2: #{discriminator_forward.1} parent=1 // loop_pre_header
      _
    $region3: #{discriminator_forward.1} parent=1 // loop_header
      %s10 = sphi 0, %s14
      %p11 = scmp.ge.s32.totalorder %s10, 6
      %s20 = sphi 0, %s22
      %s23 = sphi 0, %s20
      %s24 = sphi 0, %s23
      %s40 = sphi 0, %s24
      %s44 = sphi 0, %s44
      %s46 = sphi 0, %s44
      %s47 = sphi 0, %s46
      %s61 = sphi 0, %s47
      %s65 = sphi 0, %s65
      %s67 = sphi 0, %s65
      %s68 = sphi 0, %s67
      %s82 = sphi 0, %s68
      %s86 = sphi 0, %s86
      %s88 = sphi 0, %s86
      %s89 = sphi 0, %s88
      %s103 = sphi 0, %s89
      %s109 = sphi 0, %s111
      %s112 = sphi 0, %s109
      %s113 = sphi 0, %s112
      %s129 = sphi 0, %s113
    $region4: #{discriminator_forward.1} parent=1 // loop_header_branch
      %13 = sbr.rel (%p11) target = $region8
    $region5: #{discriminator_forward.1} parent=1 // loop_body
      %s15 = ssub.s32 %s10, 1
      %s16 = ssub.s32 %s10, 2
      %s17 = sadd.s32 %s10, 1
      %s18 = ssub.s32 %s10, %s17
      %p19 = scmp.eq.s32.totalorder %s18, 0
      %s21 = sadd.s32 %s20, 1
      %s22 = scalar_select %p19, %s20, %s21
      %p25 = pneg %p19
      %p26 = scmp.eq.s32.totalorder %s10, 3
      %p27 = por %p25, %p26
      %p28 = scmp.ne.s32.totalorder %s20, %s23
      %p29 = scmp.eq.s32.totalorder %s10, 0
      %p30 = por %p28, %p29
      %p31 = scmp.ne.s32.totalorder %s20, %s23
      %p32 = scmp.eq.s32.totalorder %s15, 3
      %p33 = por %p31, %p32
      %p34 = scmp.ne.s32.totalorder %s23, %s24
      %p35 = scmp.eq.s32.totalorder %s15, 0
      %p36 = por %p34, %p35
      %p37 = scmp.ne.s32.totalorder %s23, %s24
      %p38 = scmp.eq.s32.totalorder %s16, 3
      %p39 = por %p37, %p38
      %p41 = scmp.ne.s32.totalorder %s24, %s40
      %p42 = scmp.eq.s32.totalorder %s16, 0
      %p43 = por %p41, %p42
      %s45 = sadd.s32 %s44, 1
      %p48 = scmp.eq.s32.totalorder %s10, 3
      %p49 = scmp.ne.s32.totalorder %s44, %s46
      %p50 = scmp.eq.s32.totalorder %s10, 0
      %p51 = por %p49, %p50
      %p52 = scmp.ne.s32.totalorder %s44, %s46
      %p53 = scmp.eq.s32.totalorder %s15, 3
      %p54 = por %p52, %p53
      %p55 = scmp.ne.s32.totalorder %s46, %s47
      %p56 = scmp.eq.s32.totalorder %s15, 0
      %p57 = por %p55, %p56
      %p58 = scmp.ne.s32.totalorder %s46, %s47
      %p59 = scmp.eq.s32.totalorder %s16, 3
      %p60 = por %p58, %p59
      %p62 = scmp.ne.s32.totalorder %s47, %s61
      %p63 = scmp.eq.s32.totalorder %s16, 0
      %p64 = por %p62, %p63
      %s66 = sadd.s32 %s65, 1
      %p69 = scmp.eq.s32.totalorder %s10, 3
      %p70 = scmp.ne.s32.totalorder %s65, %s67
      %p71 = scmp.eq.s32.totalorder %s10, 0
      %p72 = por %p70, %p71
      %p73 = scmp.ne.s32.totalorder %s65, %s67
      %p74 = scmp.eq.s32.totalorder %s15, 3
      %p75 = por %p73, %p74
      %p76 = scmp.ne.s32.totalorder %s67, %s68
      %p77 = scmp.eq.s32.totalorder %s15, 0
      %p78 = por %p76, %p77
      %p79 = scmp.ne.s32.totalorder %s67, %s68
      %p80 = scmp.eq.s32.totalorder %s16, 3
      %p81 = por %p79, %p80
      %p83 = scmp.ne.s32.totalorder %s68, %s82
      %p84 = scmp.eq.s32.totalorder %s16, 0
      %p85 = por %p83, %p84
      %s87 = sadd.s32 %s86, 1
      %p90 = scmp.eq.s32.totalorder %s10, 3
      %p91 = scmp.ne.s32.totalorder %s86, %s88
      %p92 = scmp.eq.s32.totalorder %s10, 0
      %p93 = por %p91, %p92
      %p94 = scmp.ne.s32.totalorder %s86, %s88
      %p95 = scmp.eq.s32.totalorder %s15, 3
      %p96 = por %p94, %p95
      %p97 = scmp.ne.s32.totalorder %s88, %s89
      %p98 = scmp.eq.s32.totalorder %s15, 0
      %p99 = por %p97, %p98
      %p100 = scmp.ne.s32.totalorder %s88, %s89
      %p101 = scmp.eq.s32.totalorder %s16, 3
      %p102 = por %p100, %p101
      %p104 = scmp.ne.s32.totalorder %s89, %s103
      %p105 = scmp.eq.s32.totalorder %s16, 0
      %p106 = por %p104, %p105
      %s107 = ssub.s32 %s10, %s17
      %p108 = scmp.eq.s32.totalorder %s107, 0
      %s110 = sadd.s32 %s109, 1
      %s111 = scalar_select %p108, %s109, %s110
      %p114 = pneg %p108
      %p115 = scmp.eq.s32.totalorder %s10, 3
      %p116 = por %p114, %p115
      %p117 = scmp.ne.s32.totalorder %s109, %s112
      %p118 = scmp.eq.s32.totalorder %s10, 0
      %p119 = por %p117, %p118
      %p120 = scmp.ne.s32.totalorder %s109, %s112
      %p121 = scmp.eq.s32.totalorder %s15, 3
      %p122 = por %p120, %p121
      %p123 = scmp.ne.s32.totalorder %s112, %s113
      %p124 = scmp.eq.s32.totalorder %s15, 0
      %p125 = por %p123, %p124
      %p126 = scmp.ne.s32.totalorder %s112, %s113
      %p127 = scmp.eq.s32.totalorder %s16, 3
      %p128 = por %p126, %p127
      %p130 = scmp.ne.s32.totalorder %s113, %s129
      %p131 = scmp.eq.s32.totalorder %s16, 0
      %p132 = por %p130, %p131
      %p133 = scmp.le.s32.totalorder 1, %s10
      %p134 = scmp.lt.s32.totalorder %s10, 5
      %p135 = pnand %p133, %p134
      %p136 = pneg %p135
      // Predicated region
      $region9: #{discriminator_forward.1} parent=5 // pred_check
        _
      $region10: #{discriminator_forward.1} parent=5 // pred_check_branch
        %138 = sbr.rel (%p135) target = $region12
      $region11: #{discriminator_forward.1} parent=5 // pred_region
        %s139 = ssub.s32 %s10, 1
        // Predicated region
        $region13: #{discriminator_forward.1} parent=11 // pred_check
          %p140 = pneg %p57
        $region14: #{discriminator_forward.1} parent=11 // pred_check_branch
          %142 = sbr.rel (%p140) target = $region16
        $region15: #{discriminator_forward.1} parent=11 // pred_region
          _
        $region16: #{discriminator_forward.1} parent=11 // pred_fallthru
          _
        // Predicated region
        $region17: #{discriminator_forward.1} parent=11 // pred_check
          %p143 = pneg %p78
        $region18: #{discriminator_forward.1} parent=11 // pred_check_branch
          %145 = sbr.rel (%p143) target = $region20
        $region19: #{discriminator_forward.1} parent=11 // pred_region
          _
        $region20: #{discriminator_forward.1} parent=11 // pred_fallthru
          _
        // Predicated region
        $region21: #{discriminator_forward.1} parent=11 // pred_check
          %p146 = pneg %p99
        $region22: #{discriminator_forward.1} parent=11 // pred_check_branch
          %148 = sbr.rel (%p146) target = $region24
        $region23: #{discriminator_forward.1} parent=11 // pred_region
          _
        $region24: #{discriminator_forward.1} parent=11 // pred_fallthru
          _
      $region12: #{discriminator_forward.1} parent=5 // pred_fallthru
        _
      %p149 = scmp.lt.s32.totalorder %s10, 4
      // Predicated region
      $region25: #{discriminator_forward.1} parent=5 // pred_check
        %p150 = pneg %p149
      $region26: #{discriminator_forward.1} parent=5 // pred_check_branch
        %152 = sbr.rel (%p150) target = $region28
      $region27: #{discriminator_forward.1} parent=5 // pred_region
        // Predicated region
        $region29: #{discriminator_forward.1} parent=27 // pred_check
          %p153 = pneg %p30
        $region30: #{discriminator_forward.1} parent=27 // pred_check_branch
          %155 = sbr.rel (%p153) target = $region32
        $region31: #{discriminator_forward.1} parent=27 // pred_region
          %s156 = sand.u32 %s20, 1
          %s157 = sand.u32 %s20, 1
          %s158 = smul.addr %s157, 64
          %s159 = scalar_lea.vmem [#allocation3], %s158
          %s160 = smul.addr %s10, 2
          %s161 = smul.addr %s160, 8
          %s162 = scalar_lea.vmem %s0, %s161
          // Predicated region
          $region33: #{discriminator_forward.1} parent=31 // pred_check
            _
          $region34: #{discriminator_forward.1} parent=31 // pred_check_branch
            %164 = sbr.rel (0) target = $region36
          $region35: #{discriminator_forward.1} parent=31 // pred_region
            // Predicated region
            $region37: #{discriminator_forward.1} parent=35 // pred_check
              _
            $region38: #{discriminator_forward.1} parent=35 // pred_check_branch
              %166 = sbr.rel (0) target = $region40
            $region39: #{discriminator_forward.1} parent=35 // pred_region
              // Predicated region
              $region52: #{discriminator_forward.1} parent=39 // pred_check
                _
              $region53: #{discriminator_forward.1} parent=39 // pred_check_branch
                %195 = sbr.rel (0) target = $region55
              $region54: #{discriminator_forward.1} parent=39 // pred_region
                loop: start=0, step=1, limit=1
                $region56: #{discriminator_forward.1} parent=54 // loop_pre_header
                  _
                $region57: #{discriminator_forward.1} parent=54 // loop_header
                  %s197 = sphi 0, %s201
                  %p198 = scmp.ge.s32.totalorder %s197, 1
                  %s202 = sphi %s162, %s162
                  %s203 = sphi %s159, %s159
                $region58: #{discriminator_forward.1} parent=54 // loop_header_branch
                  %200 = sbr.rel (%p198) target = $region62
                $region59: #{discriminator_forward.1} parent=54 // loop_body
                  %v204 = vld [vmem:[%s202] sm:$0xff]
                  %205 = vst [vmem:[%s203] sm:$0xff] %v204
                  %v206 = vld [vmem:[%s202 + $0x8] sm:$0xff]
                  %207 = vst [vmem:[%s203 + $0x8] sm:$0xff] %v206
                  %v208 = vld [vmem:[%s202 + $0x40] sm:$0xff]
                  %209 = vst [vmem:[%s203 + $0x10] sm:$0xff] %v208
                  %v210 = vld [vmem:[%s202 + $0x48] sm:$0xff]
                  %211 = vst [vmem:[%s203 + $0x18] sm:$0xff] %v210
                  %v212 = vld [vmem:[%s202 + $0x80] sm:$0xff]
                  %213 = vst [vmem:[%s203 + $0x20] sm:$0xff] %v212
                  %v214 = vld [vmem:[%s202 + $0x88] sm:$0xff]
                  %215 = vst [vmem:[%s203 + $0x28] sm:$0xff] %v214
                  %v216 = vld [vmem:[%s202 + $0xc0] sm:$0xff]
                  %217 = vst [vmem:[%s203 + $0x30] sm:$0xff] %v216
                  %v218 = vld [vmem:[%s202 + $0xc8] sm:$0xff]
                  %219 = vst [vmem:[%s203 + $0x38] sm:$0xff] %v218
                $region60: #{discriminator_forward.1} parent=54 // loop_footer
                  %s201 = sadd.s32 1, %s197
                $region61: #{discriminator_forward.1} parent=54 // loop_footer_branch
                  %196 = sbr.rel target = $region57
                $region62: #{discriminator_forward.1} parent=54 // loop_exit
                  _
              $region55: #{discriminator_forward.1} parent=39 // pred_fallthru
                _
              // Predicated region
              $region63: #{discriminator_forward.1} parent=39 // pred_check
                _
              $region64: #{discriminator_forward.1} parent=39 // pred_check_branch
                %221 = sbr.rel target = $region66
              $region65: #{discriminator_forward.1} parent=39 // pred_region
                _
              $region66: #{discriminator_forward.1} parent=39 // pred_fallthru
                _
            $region40: #{discriminator_forward.1} parent=35 // pred_fallthru
              _
            // Predicated region
            $region41: #{discriminator_forward.1} parent=35 // pred_check
              _
            $region42: #{discriminator_forward.1} parent=35 // pred_check_branch
              %168 = sbr.rel target = $region44
            $region43: #{discriminator_forward.1} parent=35 // pred_region
              loop: start=0, step=1, limit=1
              $region45: #{discriminator_forward.1} parent=43 // loop_pre_header
                _
              $region46: #{discriminator_forward.1} parent=43 // loop_header
                %s171 = sphi 0, %s175
                %p172 = scmp.ge.s32.totalorder %s171, 1
                %s176 = sphi %s162, %s162
                %s177 = sphi %s159, %s159
              $region47: #{discriminator_forward.1} parent=43 // loop_header_branch
                %174 = sbr.rel (%p172) target = $region51
              $region48: #{discriminator_forward.1} parent=43 // loop_body
                %v178 = vld [vmem:[%s176] sm:$0xff]
                %179 = vst [vmem:[%s177] sm:$0xff] %v178
                %v180 = vld [vmem:[%s176 + $0x8] sm:$0xff]
                %181 = vst [vmem:[%s177 + $0x8] sm:$0xff] %v180
                %v182 = vld [vmem:[%s176 + $0x40] sm:$0xff]
                %183 = vst [vmem:[%s177 + $0x10] sm:$0xff] %v182
                %v184 = vld [vmem:[%s176 + $0x48] sm:$0xff]
                %185 = vst [vmem:[%s177 + $0x18] sm:$0xff] %v184
                %v186 = vld [vmem:[%s176 + $0x80] sm:$0xff]
                %187 = vst [vmem:[%s177 + $0x20] sm:$0xff] %v186
                %v188 = vld [vmem:[%s176 + $0x88] sm:$0xff]
                %189 = vst [vmem:[%s177 + $0x28] sm:$0xff] %v188
                %v190 = vld [vmem:[%s176 + $0xc0] sm:$0xff]
                %191 = vst [vmem:[%s177 + $0x30] sm:$0xff] %v190
                %v192 = vld [vmem:[%s176 + $0xc8] sm:$0xff]
                %193 = vst [vmem:[%s177 + $0x38] sm:$0xff] %v192
              $region49: #{discriminator_forward.1} parent=43 // loop_footer
                %s175 = sadd.s32 1, %s171
              $region50: #{discriminator_forward.1} parent=43 // loop_footer_branch
                %170 = sbr.rel target = $region46
              $region51: #{discriminator_forward.1} parent=43 // loop_exit
                _
            $region44: #{discriminator_forward.1} parent=35 // pred_fallthru
              _
          $region36: #{discriminator_forward.1} parent=31 // pred_fallthru
            _
          %222 = vnop
        $region32: #{discriminator_forward.1} parent=27 // pred_fallthru
          _
      $region28: #{discriminator_forward.1} parent=5 // pred_fallthru
        _
      %p223 = scmp.le.s32.totalorder 1, %s10
      %p224 = scmp.lt.s32.totalorder %s10, 5
      %p225 = pnand %p223, %p224
      %p226 = pneg %p225
      // Predicated region
      $region67: #{discriminator_forward.1} parent=5 // pred_check
        _
      $region68: #{discriminator_forward.1} parent=5 // pred_check_branch
        %228 = sbr.rel (%p225) target = $region70
      $region69: #{discriminator_forward.1} parent=5 // pred_region
        %s229 = ssub.s32 %s10, 1
        %s230 = sand.u32 %s23, 1
        %s231 = sand.u32 %s23, 1
        %s232 = smul.addr %s231, 64
        %s233 = scalar_lea.vmem [#allocation3], %s232
        // Predicated region
        $region71: #{discriminator_forward.1} parent=69 // pred_check
          %p234 = pneg %p36
        $region72: #{discriminator_forward.1} parent=69 // pred_check_branch
          %236 = sbr.rel (%p234) target = $region74
        $region73: #{discriminator_forward.1} parent=69 // pred_region
          _
        $region74: #{discriminator_forward.1} parent=69 // pred_fallthru
          _
        %s237 = sand.u32 %s23, 1
        %s238 = sand.u32 %s23, 1
        %s239 = smul.addr %s238, 64
        %s240 = scalar_lea.vmem [#allocation3], %s239
        %p241 = pneg %p36
        %p242 = pneg %p33
        %p243 = pneg %p57
        %p244 = pneg %p54
        %p245 = pneg %p78
        %p246 = pneg %p75
        %p247 = pneg %p99
        %p248 = pneg %p96
        %p249 = pneg %p125
        %p250 = pneg %p122
        %p251 = scmp.lt.s32.totalorder %s15, 3
        %s252 = scalar_select %p251, %s15, 3
        %s253 = smul.addr %s252, 8
        %s254 = scalar_lea.vmem %s4, %s253
        %p255 = scmp.lt.s32.totalorder %s15, 3
        %s256 = scalar_select %p255, %s15, 3
        %s257 = smul.addr %s256, 8
        %s258 = scalar_lea.vmem %s4, %s257
        %v260 = vld [vmem:[%s3] sm:$0x1]
        %v261 = vld [vmem:[%s3 + $0x1] sm:$0x1]
        %v262 = vld [vmem:[%s3 + $0x2] sm:$0x1]
        %v263 = vld [vmem:[%s3 + $0x3] sm:$0x1]
        %v264 = vld [vmem:[%s3 + $0x4] sm:$0x1]
        %v265 = vld [vmem:[%s3 + $0x8] sm:$0xf]
        %v266 = vld [vmem:[%s3 + $0x10] sm:$0xff]
        %v267 = vld [vmem:[%s3 + $0x18] sm:$0xff]
        %v268 = vld [vmem:[%s233] sm:$0xff]
        %v269 = vld [vmem:[%s233 + $0x8] sm:$0xff]
        %v270 = vld [vmem:[%s233 + $0x10] sm:$0xff]
        %v271 = vld [vmem:[%s233 + $0x18] sm:$0xff]
        %v272 = vld [vmem:[%s233 + $0x20] sm:$0xff]
        %v273 = vld [vmem:[%s233 + $0x28] sm:$0xff]
        %v274 = vld [vmem:[%s233 + $0x30] sm:$0xff]
        %v275 = vld [vmem:[%s233 + $0x38] sm:$0xff]
        %v276 = vlaneseq
        %v277 = vshrl.u32 %v276, 7
        %v278 = vsub.s32 0, %v277
        %v279 = vrot.slane %v260, %v278
        %vm280 = vcmask 31744
        %v282 = vsel %vm280, %v268, 0
        %v285 = vsel %vm280, %v269, 0
        %v288 = vsel %vm280, %v270, 0
        %v291 = vsel %vm280, %v271, 0
        %v294 = vsel %vm280, %v272, 0
        %v297 = vsel %vm280, %v273, 0
        %v300 = vsel %vm280, %v274, 0
        %v303 = vsel %vm280, %v275, 0
        %vm305 = vcmask 1043456
        %v307 = vsel %vm305, %v265, 0
        %309 = vmatprep.subr.mxu0 0.0
        %310 = vmatpush1.msra.mxu0 %v307
        %311 = vmatprep.subr.mxu0 0.0
        %312 = vmatpush1.msra.mxu0 0.0
        %313 = vmatprep.subr.mxu0 0.0
        %314 = vmatpush1.msra.mxu0 0.0
        %315 = vmatprep.subr.mxu0 0.0
        %316 = vmatpush1.msra.mxu0 0.0
        %317 = vmatprep.subr.mxu0 0.0
        %318 = vmatpush1.msra.mxu0 0.0
        %319 = vmatprep.subr.mxu0 0.0
        %320 = vmatpush1.msra.mxu0 0.0
        %321 = vmatprep.subr.mxu0 0.0
        %322 = vmatpush1.msra.mxu0 0.0
        %323 = vmatprep.subr.mxu0 0.0
        %324 = vmatpush1.msra.mxu0 0.0
        %325 = vmatprep.subr.mxu0 0.0
        %326 = vmatpush1.msra.mxu0 0.0
        %327 = vmatprep.subr.mxu0 0.0
        %328 = vmatpush1.msra.mxu0 0.0
        %329 = vmatprep.subr.mxu0 0.0
        %330 = vmatpush1.msra.mxu0 0.0
        %331 = vmatprep.subr.mxu0 0.0
        %332 = vmatpush1.msra.mxu0 0.0
        %333 = vmatprep.subr.mxu0 0.0
        %334 = vmatpush1.msra.mxu0 0.0
        %335 = vmatprep.subr.mxu0 0.0
        %336 = vmatpush1.msra.mxu0 0.0
        %337 = vmatprep.subr.mxu0 0.0
        %338 = vmatpush1.msra.mxu0 0.0
        %339 = vmatprep.subr.mxu0 0.0
        %340 = vmatpush1.msra.mxu0 0.0
        %341 = vmatprep.subr.mxu0 0.0
        %342 = vmatpush1.msra.mxu0 0.0
        %343 = vmatprep.subr.mxu0 0.0
        %344 = vmatpush1.msra.mxu0 0.0
        %345 = vmatprep.subr.mxu0 0.0
        %346 = vmatpush1.msra.mxu0 0.0
        %347 = vmatprep.subr.mxu0 0.0
        %348 = vmatpush1.msra.mxu0 0.0
        %349 = vmatprep.subr.mxu0 0.0
        %350 = vmatpush1.msra.mxu0 0.0
        %351 = vmatprep.subr.mxu0 0.0
        %352 = vmatpush1.msra.mxu0 0.0
        %353 = vmatprep.subr.mxu0 0.0
        %354 = vmatpush1.msra.mxu0 0.0
        %355 = vmatprep.subr.mxu0 0.0
        %356 = vmatpush1.msra.mxu0 0.0
        %357 = vmatprep.subr.mxu0 0.0
        %358 = vmatpush1.msra.mxu0 0.0
        %359 = vmatprep.subr.mxu0 0.0
        %360 = vmatpush1.msra.mxu0 0.0
        %361 = vmatprep.subr.mxu0 0.0
        %362 = vmatpush1.msra.mxu0 0.0
        %363 = vmatprep.subr.mxu0 0.0
        %364 = vmatpush1.msra.mxu0 0.0
        %365 = vmatprep.subr.mxu0 0.0
        %366 = vmatpush1.msra.mxu0 0.0
        %367 = vmatprep.subr.mxu0 0.0
        %368 = vmatpush1.msra.mxu0 0.0
        %369 = vmatprep.subr.mxu0 0.0
        %370 = vmatpush1.msra.mxu0 0.0
        %371 = vmatprep.subr.mxu0 0.0
        %372 = vmatpush1.msra.mxu0 0.0
        %373 = vmatprep.mubr.f32.mxu0 0.0
        %374 = vmatmul.mubr.f32.gmra.mrb[0].mxu0 %v282
        %v375 = vpop.f32.mrb[0].mxu0
        %v376 = vadd.f32 %v279, %v375
        %v377 = vpop.f32.mrb[0].mxu0
        %378 = vmatprep.mubr.f32.mxu0 0.0
        %379 = vmatmul.mubr.f32.gmra.mrb[0].mxu0 %v285
        %v380 = vpop.f32.mrb[0].mxu0
        %v381 = vadd.f32 %v279, %v380
        %v382 = vpop.f32.mrb[0].mxu0
        %383 = vmatprep.mubr.f32.mxu0 0.0
        %384 = vmatmul.mubr.f32.gmra.mrb[0].mxu0 %v288
        %v385 = vpop.f32.mrb[0].mxu0
        %v386 = vadd.f32 %v279, %v385
        %v387 = vpop.f32.mrb[0].mxu0
        %388 = vmatprep.mubr.f32.mxu0 0.0
        %389 = vmatmul.mubr.f32.gmra.mrb[0].mxu0 %v291
        %v390 = vpop.f32.mrb[0].mxu0
        %v391 = vadd.f32 %v279, %v390
        %v392 = vpop.f32.mrb[0].mxu0
        %393 = vmatprep.mubr.f32.mxu0 0.0
        %394 = vmatmul.mubr.f32.gmra.mrb[0].mxu0 %v294
        %v395 = vpop.f32.mrb[0].mxu0
        %v396 = vadd.f32 %v279, %v395
        %v397 = vpop.f32.mrb[0].mxu0
        %398 = vmatprep.mubr.f32.mxu0 0.0
        %399 = vmatmul.mubr.f32.gmra.mrb[0].mxu0 %v297
        %v400 = vpop.f32.mrb[0].mxu0
        %v401 = vadd.f32 %v279, %v400
        %v402 = vpop.f32.mrb[0].mxu0
        %403 = vmatprep.mubr.f32.mxu0 0.0
        %404 = vmatmul.mubr.f32.gmra.mrb[0].mxu0 %v300
        %v405 = vpop.f32.mrb[0].mxu0
        %v406 = vadd.f32 %v279, %v405
        %v407 = vpop.f32.mrb[0].mxu0
        %408 = vmatprep.mubr.f32.mxu0 0.0
        %409 = vmatmul.mubr.f32.gmra.mrb[0].mxu0 %v303
        %v410 = vpop.f32.mrb[0].mxu0
        %v411 = vadd.f32 %v279, %v410
        %v412 = vpop.f32.mrb[0].mxu0
        %413 = vdwg.mxu0
        %vm414 = vcmp.ge.f32.partialorder %v376, 0.0
        %vm415 = vcmp.ge.f32.partialorder %v381, 0.0
        %vm416 = vcmp.ge.f32.partialorder %v386, 0.0
        %vm417 = vcmp.ge.f32.partialorder %v391, 0.0
        %vm418 = vcmp.ge.f32.partialorder %v396, 0.0
        %vm419 = vcmp.ge.f32.partialorder %v401, 0.0
        %vm420 = vcmp.ge.f32.partialorder %v406, 0.0
        %vm421 = vcmp.ge.f32.partialorder %v411, 0.0
        %v422 = vmul.f32 %v376, 0.2
        %v423 = vmul.f32 %v381, 0.2
        %v424 = vmul.f32 %v386, 0.2
        %v425 = vmul.f32 %v391, 0.2
        %v426 = vmul.f32 %v396, 0.2
        %v427 = vmul.f32 %v401, 0.2
        %v428 = vmul.f32 %v406, 0.2
        %v429 = vmul.f32 %v411, 0.2
        %v430 = vsel %vm414, %v376, %v422
        %v431 = vsel %vm415, %v381, %v423
        %v432 = vsel %vm416, %v386, %v424
        %v433 = vsel %vm417, %v391, %v425
        %v434 = vsel %vm418, %v396, %v426
        %v435 = vsel %vm419, %v401, %v427
        %v436 = vsel %vm420, %v406, %v428
        %v437 = vsel %vm421, %v411, %v429
        %vm438 = vcmask 261120
        %v439 = vsel %vm438, %v430, 0.0
        %v440 = vsel %vm438, %v432, 0.0
        %v441 = vadd.f32 %v439, %v440
        %v442 = vsel %vm438, %v434, 0.0
        %v443 = vadd.f32 %v441, %v442
        %v444 = vsel %vm438, %v436, 0.0
        %v445 = vadd.f32 %v443, %v444
        %v446 = vsel %vm438, %v431, 0.0
        %v447 = vsel %vm438, %v433, 0.0
        %v448 = vadd.f32 %v446, %v447
        %v449 = vsel %vm438, %v435, 0.0
        %v450 = vadd.f32 %v448, %v449
        %v451 = vsel %vm438, %v437, 0.0
        %v452 = vadd.f32 %v450, %v451
        %v453 = vrcp.pop 4.0
        %v454 = vmul.f32 %v445, %v453
        %v455 = vmul.f32 %v452, %v453
        %v456 = vsub.f32 %v430, %v454
        %v457 = vsub.f32 %v431, %v455
        %v458 = vsub.f32 %v432, %v454
        %v459 = vsub.f32 %v433, %v455
        %v460 = vsub.f32 %v434, %v454
        %v461 = vsub.f32 %v435, %v455
        %v462 = vsub.f32 %v436, %v454
        %v463 = vsub.f32 %v437, %v455
        %v464 = vmul.f32 %v456, %v456
        %v465 = vmul.f32 %v457, %v457
        %v466 = vmul.f32 %v458, %v458
        %v467 = vmul.f32 %v459, %v459
        %v468 = vmul.f32 %v460, %v460
        %v469 = vmul.f32 %v461, %v461
        %v470 = vmul.f32 %v462, %v462
        %v471 = vmul.f32 %v463, %v463
        %v472 = vsel %vm438, %v464, 0.0
        %v473 = vsel %vm438, %v466, 0.0
        %v474 = vadd.f32 %v472, %v473
        %v475 = vsel %vm438, %v468, 0.0
        %v476 = vadd.f32 %v474, %v475
        %v477 = vsel %vm438, %v470, 0.0
        %v478 = vadd.f32 %v476, %v477
        %v479 = vsel %vm438, %v465, 0.0
        %v480 = vsel %vm438, %v467, 0.0
        %v481 = vadd.f32 %v479, %v480
        %v482 = vsel %vm438, %v469, 0.0
        %v483 = vadd.f32 %v481, %v482
        %v484 = vsel %vm438, %v471, 0.0
        %v485 = vadd.f32 %v483, %v484
        %v486 = vmul.f32 %v478, %v453
        %v487 = vmul.f32 %v485, %v453
        %v488 = vadd.f32 %v486, 1e-08
        %v489 = vadd.f32 %v487, 1e-08
        %v490 = vrsqrt.pop %v488
        %v491 = vmul.f32 %v488, %v490
        %vm492 = vcmp.eq.f32.partialorder %v488, inf
        %v493 = vsel %vm492, %v488, %v491
        %vm494 = vcmp.eq.f32.partialorder %v488, 0.0
        %v495 = vand.u32 %v488, 2147483648
        %v496 = vsel %vm494, %v495, %v493
        %v497 = vrsqrt.pop %v489
        %v498 = vmul.f32 %v489, %v497
        %vm499 = vcmp.eq.f32.partialorder %v489, inf
        %v500 = vsel %vm499, %v489, %v498
        %vm501 = vcmp.eq.f32.partialorder %v489, 0.0
        %v502 = vand.u32 %v489, 2147483648
        %v503 = vsel %vm501, %v502, %v500
        %v504 = vsel %vm438, %v496, 0.0
        %v505 = vsel %vm438, %v503, 0.0
        %v506 = vadd.f32 %v504, %v505
        %507 = vadd.xlane.f32.xlu0 %v506
        %v508 = vpop.xlane.xlu0 %507
        %v509 = vrot.slane %v508, 4
        %v510 = vadd.f32 %v508, %v509
        %v511 = vrot.slane %v510, 2
        %v512 = vadd.f32 %v510, %v511
        %v513 = vrot.slane %v512, 1
        %v514 = vadd.f32 %v512, %v513
        %s515 = vtos %v514
        %v516 = vrcp.pop 512.0
        %s517 = vtos %v516
        %s518 = smul.f32 %s515, %s517
        %519 = vst.msk [vmem:[#allocation2 + $0x2] sm:$0xff] %vm438, %v430
        %520 = vst.msk [vmem:[#allocation2 + $0xa] sm:$0xff] %vm438, %v431
        %521 = vst.msk [vmem:[#allocation2 + $0x1a] sm:$0xff] %vm438, %v432
        %522 = vst.msk [vmem:[#allocation2 + $0x22] sm:$0xff] %vm438, %v433
        %523 = vst.msk [vmem:[#allocation2 + $0x32] sm:$0xff] %vm438, %v434
        %524 = vst.msk [vmem:[#allocation2 + $0x3a] sm:$0xff] %vm438, %v435
        %525 = vst.msk [vmem:[#allocation2 + $0x4a] sm:$0xff] %vm438, %v436
        %526 = vst.msk [vmem:[#allocation2 + $0x52] sm:$0xff] %vm438, %v437
        %535 = vrot.lane.b32.xlu0 %v430, 32
        %v536 = vpop.permute.xlu0 %535
        %537 = vrot.lane.b32.xlu0 %v431, 32
        %v538 = vpop.permute.xlu0 %537
        %539 = vrot.lane.b32.xlu0 %v432, 32
        %v540 = vpop.permute.xlu0 %539
        %541 = vrot.lane.b32.xlu0 %v433, 32
        %v542 = vpop.permute.xlu0 %541
        %543 = vrot.lane.b32.xlu0 %v434, 32
        %v544 = vpop.permute.xlu0 %543
        %545 = vrot.lane.b32.xlu0 %v435, 32
        %v546 = vpop.permute.xlu0 %545
        %547 = vrot.lane.b32.xlu0 %v436, 32
        %v548 = vpop.permute.xlu0 %547
        %549 = vrot.lane.b32.xlu0 %v437, 32
        %v550 = vpop.permute.xlu0 %549
        %vm559 = vcmask 523520
        %560 = vst.msk [vmem:[#allocation2 + $0x1] sm:$0xff] %vm559, %v536
        %561 = vst.msk [vmem:[#allocation2 + $0x9] sm:$0xff] %vm559, %v538
        %562 = vst.msk [vmem:[#allocation2 + $0x19] sm:$0xff] %vm559, %v540
        %563 = vst.msk [vmem:[#allocation2 + $0x21] sm:$0xff] %vm559, %v542
        %564 = vst.msk [vmem:[#allocation2 + $0x31] sm:$0xff] %vm559, %v544
        %565 = vst.msk [vmem:[#allocation2 + $0x39] sm:$0xff] %vm559, %v546
        %566 = vst.msk [vmem:[#allocation2 + $0x49] sm:$0xff] %vm559, %v548
        %567 = vst.msk [vmem:[#allocation2 + $0x51] sm:$0xff] %vm559, %v550
        %568 = vrot.lane.b32.xlu0 %v430, 64
        %v569 = vpop.permute.xlu0 %568
        %570 = vrot.lane.b32.xlu0 %v431, 64
        %v571 = vpop.permute.xlu0 %570
        %572 = vrot.lane.b32.xlu0 %v432, 64
        %v573 = vpop.permute.xlu0 %572
        %574 = vrot.lane.b32.xlu0 %v433, 64
        %v575 = vpop.permute.xlu0 %574
        %576 = vrot.lane.b32.xlu0 %v434, 64
        %v577 = vpop.permute.xlu0 %576
        %578 = vrot.lane.b32.xlu0 %v435, 64
        %v579 = vpop.permute.xlu0 %578
        %580 = vrot.lane.b32.xlu0 %v436, 64
        %v581 = vpop.permute.xlu0 %580
        %582 = vrot.lane.b32.xlu0 %v437, 64
        %v583 = vpop.permute.xlu0 %582
        %vm592 = vcmask 785920
        %593 = vst.msk [vmem:[#allocation2] sm:$0xff] %vm592, %v569
        %594 = vst.msk [vmem:[#allocation2 + $0x8] sm:$0xff] %vm592, %v571
        %595 = vst.msk [vmem:[#allocation2 + $0x18] sm:$0xff] %vm592, %v573
        %596 = vst.msk [vmem:[#allocation2 + $0x20] sm:$0xff] %vm592, %v575
        %597 = vst.msk [vmem:[#allocation2 + $0x30] sm:$0xff] %vm592, %v577
        %598 = vst.msk [vmem:[#allocation2 + $0x38] sm:$0xff] %vm592, %v579
        %599 = vst.msk [vmem:[#allocation2 + $0x48] sm:$0xff] %vm592, %v581
        %600 = vst.msk [vmem:[#allocation2 + $0x50] sm:$0xff] %vm592, %v583
        %vm601 = vcmask 253952
        %602 = vst.msk [vmem:[#allocation2 + $0x1] sm:$0x1] %vm601, 0.0
        %603 = vst.msk [vmem:[#allocation2 + $0x19] sm:$0x1] %vm601, 0.0
        %604 = vst.msk [vmem:[#allocation2 + $0x31] sm:$0x1] %vm601, 0.0
        %605 = vst.msk [vmem:[#allocation2 + $0x49] sm:$0x1] %vm601, 0.0
        %vm606 = vcmask 778752
        %607 = vst.msk [vmem:[#allocation2 + $0x10] sm:$0x1] %vm606, 0.0
        %608 = vst.msk [vmem:[#allocation2 + $0x28] sm:$0x1] %vm606, 0.0
        %609 = vst.msk [vmem:[#allocation2 + $0x40] sm:$0x1] %vm606, 0.0
        %610 = vst.msk [vmem:[#allocation2 + $0x58] sm:$0x1] %vm606, 0.0
        %v611 = vld [vmem:[#allocation2 + $0x1] sm:$0xff]
        %v612 = vld [vmem:[#allocation2 + $0x9] sm:$0xff]
        %v613 = vld [vmem:[#allocation2 + $0x19] sm:$0xff]
        %v614 = vld [vmem:[#allocation2 + $0x21] sm:$0xff]
        %v615 = vld [vmem:[#allocation2 + $0x31] sm:$0xff]
        %v616 = vld [vmem:[#allocation2 + $0x39] sm:$0xff]
        %v617 = vld [vmem:[#allocation2 + $0x49] sm:$0xff]
        %v618 = vld [vmem:[#allocation2 + $0x51] sm:$0xff]
        %v619 = vpack.c.bf16 %v612, %v611
        %v620 = vpack.c.bf16 %v614, %v613
        %v621 = vpack.c.bf16 %v616, %v615
        %v622 = vpack.c.bf16 %v618, %v617
        %v623 = vld [vmem:[%s1] sm:$0xf]
        %v624 = vld [vmem:[%s1 + $0x4] sm:$0xf]
        %v625 = vld [vmem:[%s1 + $0x8] sm:$0xf]
        %v626 = vld [vmem:[%s1 + $0xc] sm:$0xf]
        %v627 = vld [vmem:[%s1 + $0x10] sm:$0xf]
        %v628 = vld [vmem:[%s1 + $0x14] sm:$0xf]
        %v629 = vld [vmem:[%s1 + $0x18] sm:$0xf]
        %v630 = vld [vmem:[%s1 + $0x1c] sm:$0xf]
        %v631 = vld [vmem:[%s1 + $0x20] sm:$0xf]
        %v632 = vld [vmem:[%s1 + $0x24] sm:$0xf]
        %v633 = vld [vmem:[%s1 + $0x28] sm:$0xf]
        %v634 = vld [vmem:[%s1 + $0x2c] sm:$0xf]
        %v647 = vunpack.c.l.b16 %v623
        %v648 = vunpack.c.l.b16 %v624
        %v649 = vunpack.c.l.b16 %v625
        %v650 = vunpack.c.l.b16 %v626
        %v651 = vunpack.c.l.b16 %v627
        %v652 = vunpack.c.l.b16 %v628
        %v653 = vunpack.c.l.b16 %v629
        %v654 = vunpack.c.l.b16 %v630
        %v655 = vunpack.c.l.b16 %v631
        %v656 = vunpack.c.l.b16 %v632
        %v657 = vunpack.c.l.b16 %v633
        %v658 = vunpack.c.l.b16 %v634
        %v659 = vpack.c.b16 %v648, %v647
        %v660 = vpack.c.b16 %v650, %v649
        %v661 = vpack.c.b16 %v652, %v651
        %v662 = vpack.c.b16 %v654, %v653
        %v663 = vpack.c.b16 %v656, %v655
        %v664 = vpack.c.b16 %v658, %v657
        %vm671 = vcmask 785408
        %v673 = vsel %vm671, %v619, 0
        %v676 = vsel %vm671, %v620, 0
        %v679 = vsel %vm671, %v621, 0
        %v682 = vsel %vm671, %v622, 0
        %684 = vmatprep.subr.bf16.mxu0 0
        %685 = vmatpush1.bf16.msra.mxu0 %v659
        %686 = vmatprep.subr.bf16.mxu0 0
        %687 = vmatpush1.bf16.msra.mxu0 %v660
        %688 = vmatprep.subr.bf16.mxu0 0
        %689 = vmatpush1.bf16.msra.mxu0 %v661
        %690 = vmatprep.subr.bf16.mxu0 0
        %691 = vmatpush1.bf16.msra.mxu0 %v662
        %692 = vmatprep.subr.bf16.mxu0 0
        %693 = vmatpush1.bf16.msra.mxu0 %v663
        %694 = vmatprep.subr.bf16.mxu0 0
        %695 = vmatpush1.bf16.msra.mxu0 %v664
        %696 = vmatprep.subr.bf16.mxu0 0
        %697 = vmatpush1.bf16.msra.mxu0 0
        %698 = vmatprep.subr.bf16.mxu0 0
        %699 = vmatpush1.bf16.msra.mxu0 0
        %700 = vmatprep.subr.bf16.mxu0 0
        %701 = vmatpush1.bf16.msra.mxu0 0
        %702 = vmatprep.subr.bf16.mxu0 0
        %703 = vmatpush1.bf16.msra.mxu0 0
        %704 = vmatprep.subr.bf16.mxu0 0
        %705 = vmatpush1.bf16.msra.mxu0 0
        %706 = vmatprep.subr.bf16.mxu0 0
        %707 = vmatpush1.bf16.msra.mxu0 0
        %708 = vmatprep.subr.bf16.mxu0 0
        %709 = vmatpush1.bf16.msra.mxu0 0
        %710 = vmatprep.subr.bf16.mxu0 0
        %711 = vmatpush1.bf16.msra.mxu0 0
        %712 = vmatprep.subr.bf16.mxu0 0
        %713 = vmatpush1.bf16.msra.mxu0 0
        %714 = vmatprep.subr.bf16.mxu0 0
        %715 = vmatpush1.bf16.msra.mxu0 0
        %716 = vmatprep.mubr.bf16.mxu0 0
        %717 = vmatmul.mubr.bf16.gmra.mrb[0].mxu0 %v673
        %v718 = vpop.f32.mrb[0].mxu0
        %v719 = vadd.f32 0.0, %v718
        %v720 = vpop.f32.mrb[0].mxu0
        %v721 = vpop.f32.mrb[0].mxu0
        %v722 = vadd.f32 0.0, %v721
        %v723 = vpop.f32.mrb[0].mxu0
        %724 = vmatprep.mubr.bf16.mxu0 0
        %725 = vmatmul.mubr.bf16.gmra.mrb[0].mxu0 %v676
        %v726 = vpop.f32.mrb[0].mxu0
        %v727 = vadd.f32 0.0, %v726
        %v728 = vpop.f32.mrb[0].mxu0
        %v729 = vpop.f32.mrb[0].mxu0
        %v730 = vadd.f32 0.0, %v729
        %v731 = vpop.f32.mrb[0].mxu0
        %732 = vmatprep.mubr.bf16.mxu0 0
        %733 = vmatmul.mubr.bf16.gmra.mrb[0].mxu0 %v679
        %v734 = vpop.f32.mrb[0].mxu0
        %v735 = vadd.f32 0.0, %v734
        %v736 = vpop.f32.mrb[0].mxu0
        %v737 = vpop.f32.mrb[0].mxu0
        %v738 = vadd.f32 0.0, %v737
        %v739 = vpop.f32.mrb[0].mxu0
        %740 = vmatprep.mubr.bf16.mxu0 0
        %741 = vmatmul.mubr.bf16.gmra.mrb[0].mxu0 %v682
        %v742 = vpop.f32.mrb[0].mxu0
        %v743 = vadd.f32 0.0, %v742
        %v744 = vpop.f32.mrb[0].mxu0
        %v745 = vpop.f32.mrb[0].mxu0
        %v746 = vadd.f32 0.0, %v745
        %v747 = vpop.f32.mrb[0].mxu0
        %748 = vdwg.mxu0
        %v749 = vlaneseq
        %v750 = vshrl.u32 %v749, 7
        %v751 = vsub.s32 0, %v750
        %v752 = vrot.slane %v261, %v751
        %v753 = vadd.f32 %v719, %v752
        %v754 = vadd.f32 %v722, %v752
        %v755 = vadd.f32 %v727, %v752
        %v756 = vadd.f32 %v730, %v752
        %v757 = vadd.f32 %v735, %v752
        %v758 = vadd.f32 %v738, %v752
        %v759 = vadd.f32 %v743, %v752
        %v760 = vadd.f32 %v746, %v752
        %v761 = vstv %s518
        %v762 = vmul.f32 %v761, %v266
        %v763 = vmul.f32 %v761, %v267
        %v764 = vadd.f32 %v753, %v762
        %v765 = vadd.f32 %v754, %v763
        %v766 = vadd.f32 %v755, %v762
        %v767 = vadd.f32 %v756, %v763
        %v768 = vadd.f32 %v757, %v762
        %v769 = vadd.f32 %v758, %v763
        %v770 = vadd.f32 %v759, %v762
        %v771 = vadd.f32 %v760, %v763
        %vm772 = vcmp.ge.f32.partialorder %v764, 0.0
        %vm773 = vcmp.ge.f32.partialorder %v765, 0.0
        %vm774 = vcmp.ge.f32.partialorder %v766, 0.0
        %vm775 = vcmp.ge.f32.partialorder %v767, 0.0
        %vm776 = vcmp.ge.f32.partialorder %v768, 0.0
        %vm777 = vcmp.ge.f32.partialorder %v769, 0.0
        %vm778 = vcmp.ge.f32.partialorder %v770, 0.0
        %vm779 = vcmp.ge.f32.partialorder %v771, 0.0
        %v780 = vmul.f32 %v764, 0.2
        %v781 = vmul.f32 %v765, 0.2
        %v782 = vmul.f32 %v766, 0.2
        %v783 = vmul.f32 %v767, 0.2
        %v784 = vmul.f32 %v768, 0.2
        %v785 = vmul.f32 %v769, 0.2
        %v786 = vmul.f32 %v770, 0.2
        %v787 = vmul.f32 %v771, 0.2
        %v788 = vsel %vm772, %v764, %v780
        %v789 = vsel %vm773, %v765, %v781
        %v790 = vsel %vm774, %v766, %v782
        %v791 = vsel %vm775, %v767, %v783
        %v792 = vsel %vm776, %v768, %v784
        %v793 = vsel %vm777, %v769, %v785
        %v794 = vsel %vm778, %v770, %v786
        %v795 = vsel %vm779, %v771, %v787
        %v796 = vcombine.low %v788, %v792
        %v797 = vcombine.high %v788, %v792
        %v799 = vunpack.c.l.s4 1983009808
        %v800 = vunpack.c.0.s8 %v799
        %v801 = vlaneseq
        %v802 = vshrl.u32 %v801, 7
        %v803 = vsub.s32 %v800, %v802
        %v804 = vrot.slane %v796, %v803
        %v806 = vunpack.c.l.s4 1983009808
        %v807 = vunpack.c.0.s8 %v806
        %v808 = vlaneseq
        %v809 = vshrl.u32 %v808, 7
        %v810 = vsub.s32 %v807, %v809
        %v811 = vrot.slane %v797, %v810
        %v812 = vcombine.low %v790, %v794
        %v813 = vcombine.high %v790, %v794
        %v815 = vunpack.c.l.s4 1983009808
        %v816 = vunpack.c.0.s8 %v815
        %v817 = vlaneseq
        %v818 = vshrl.u32 %v817, 7
        %v819 = vsub.s32 %v816, %v818
        %v820 = vrot.slane %v812, %v819
        %v822 = vunpack.c.l.s4 1983009808
        %v823 = vunpack.c.0.s8 %v822
        %v824 = vlaneseq
        %v825 = vshrl.u32 %v824, 7
        %v826 = vsub.s32 %v823, %v825
        %v827 = vrot.slane %v813, %v826
        %v828 = vcombine.low %v804, %v820
        %v829 = vcombine.high %v804, %v820
        %v831 = vunpack.c.l.s4 1934713408
        %v832 = vunpack.c.0.s8 %v831
        %v833 = vlaneseq
        %v834 = vshrl.u32 %v833, 7
        %v835 = vsub.s32 %v832, %v834
        %v836 = vrot.slane %v828, %v835
        %v838 = vunpack.c.l.s4 1934713408
        %v839 = vunpack.c.0.s8 %v838
        %v840 = vlaneseq
        %v841 = vshrl.u32 %v840, 7
        %v842 = vsub.s32 %v839, %v841
        %v843 = vrot.slane %v829, %v842
        %v844 = vcombine.low %v811, %v827
        %v845 = vcombine.high %v811, %v827
        %v847 = vunpack.c.l.s4 1934713408
        %v848 = vunpack.c.0.s8 %v847
        %v849 = vlaneseq
        %v850 = vshrl.u32 %v849, 7
        %v851 = vsub.s32 %v848, %v850
        %v852 = vrot.slane %v844, %v851
        %v854 = vunpack.c.l.s4 1934713408
        %v855 = vunpack.c.0.s8 %v854
        %v856 = vlaneseq
        %v857 = vshrl.u32 %v856, 7
        %v858 = vsub.s32 %v855, %v857
        %v859 = vrot.slane %v845, %v858
        %v860 = vcombine.high %v836, 0.0
        %v861 = vcombine.high %v843, 0.0
        %v862 = vcombine.high %v852, 0.0
        %v863 = vcombine.high %v859, 0.0
        %v864 = vcombine.low %v789, %v793
        %v865 = vcombine.high %v789, %v793
        %v867 = vunpack.c.l.s4 1983009808
        %v868 = vunpack.c.0.s8 %v867
        %v869 = vlaneseq
        %v870 = vshrl.u32 %v869, 7
        %v871 = vsub.s32 %v868, %v870
        %v872 = vrot.slane %v864, %v871
        %v874 = vunpack.c.l.s4 1983009808
        %v875 = vunpack.c.0.s8 %v874
        %v876 = vlaneseq
        %v877 = vshrl.u32 %v876, 7
        %v878 = vsub.s32 %v875, %v877
        %v879 = vrot.slane %v865, %v878
        %v880 = vcombine.low %v791, %v795
        %v881 = vcombine.high %v791, %v795
        %v883 = vunpack.c.l.s4 1983009808
        %v884 = vunpack.c.0.s8 %v883
        %v885 = vlaneseq
        %v886 = vshrl.u32 %v885, 7
        %v887 = vsub.s32 %v884, %v886
        %v888 = vrot.slane %v880, %v887
        %v890 = vunpack.c.l.s4 1983009808
        %v891 = vunpack.c.0.s8 %v890
        %v892 = vlaneseq
        %v893 = vshrl.u32 %v892, 7
        %v894 = vsub.s32 %v891, %v893
        %v895 = vrot.slane %v881, %v894
        %v896 = vcombine.low %v872, %v888
        %v897 = vcombine.high %v872, %v888
        %v899 = vunpack.c.l.s4 1934713408
        %v900 = vunpack.c.0.s8 %v899
        %v901 = vlaneseq
        %v902 = vshrl.u32 %v901, 7
        %v903 = vsub.s32 %v900, %v902
        %v904 = vrot.slane %v896, %v903
        %v906 = vunpack.c.l.s4 1934713408
        %v907 = vunpack.c.0.s8 %v906
        %v908 = vlaneseq
        %v909 = vshrl.u32 %v908, 7
        %v910 = vsub.s32 %v907, %v909
        %v911 = vrot.slane %v897, %v910
        %v912 = vcombine.low %v879, %v895
        %v913 = vcombine.high %v879, %v895
        %v915 = vunpack.c.l.s4 1934713408
        %v916 = vunpack.c.0.s8 %v915
        %v917 = vlaneseq
        %v918 = vshrl.u32 %v917, 7
        %v919 = vsub.s32 %v916, %v918
        %v920 = vrot.slane %v912, %v919
        %v922 = vunpack.c.l.s4 1934713408
        %v923 = vunpack.c.0.s8 %v922
        %v924 = vlaneseq
        %v925 = vshrl.u32 %v924, 7
        %v926 = vsub.s32 %v923, %v925
        %v927 = vrot.slane %v913, %v926
        %v928 = vcombine.high %v904, 0.0
        %v929 = vcombine.high %v911, 0.0
        %v930 = vcombine.high %v920, 0.0
        %v931 = vcombine.high %v927, 0.0
        %933 = vrot.lane.b32.xlu0 %v860, 32
        %v934 = vpop.permute.xlu0 %933
        %937 = vrot.lane.b32.xlu0 %v843, 64
        %v938 = vpop.permute.xlu0 %937
        %941 = vrot.lane.b32.xlu0 %v861, 96
        %v942 = vpop.permute.xlu0 %941
        %945 = vrot.lane.b32.xlu0 %v862, 32
        %v946 = vpop.permute.xlu0 %945
        %949 = vrot.lane.b32.xlu0 %v859, 64
        %v950 = vpop.permute.xlu0 %949
        %953 = vrot.lane.b32.xlu0 %v863, 96
        %v954 = vpop.permute.xlu0 %953
        %957 = vrot.lane.b32.xlu0 %v928, 32
        %v958 = vpop.permute.xlu0 %957
        %961 = vrot.lane.b32.xlu0 %v911, 64
        %v962 = vpop.permute.xlu0 %961
        %965 = vrot.lane.b32.xlu0 %v929, 96
        %v966 = vpop.permute.xlu0 %965
        %969 = vrot.lane.b32.xlu0 %v930, 32
        %v970 = vpop.permute.xlu0 %969
        %973 = vrot.lane.b32.xlu0 %v927, 64
        %v974 = vpop.permute.xlu0 %973
        %977 = vrot.lane.b32.xlu0 %v931, 96
        %v978 = vpop.permute.xlu0 %977
        %v980 = vsel %vm438, %v836, %v934
        %vm981 = vcmask 523264
        %v982 = vsel %vm981, %v980, %v938
        %v983 = vsel %vm671, %v982, %v942
        %v984 = vsel %vm438, %v852, %v946
        %v985 = vsel %vm981, %v984, %v950
        %v986 = vsel %vm671, %v985, %v954
        %v987 = vsel %vm438, %v904, %v958
        %v988 = vsel %vm981, %v987, %v962
        %v989 = vsel %vm671, %v988, %v966
        %v990 = vsel %vm438, %v920, %v970
        %v991 = vsel %vm981, %v990, %v974
        %v992 = vsel %vm671, %v991, %v978
        %v993 = vpack.c.bf16 %v983, %v983
        %v994 = vpack.c.bf16 %v986, %v986
        %v995 = vpack.c.bf16 %v989, %v989
        %v996 = vpack.c.bf16 %v992, %v992
        %v997 = vld [vmem:[%s2] sm:$0xf]
        %v998 = vld [vmem:[%s2 + $0x4] sm:$0xf]
        %v999 = vld [vmem:[%s2 + $0x8] sm:$0xf]
        %v1000 = vld [vmem:[%s2 + $0xc] sm:$0xf]
        %v1001 = vld [vmem:[%s2 + $0x10] sm:$0xf]
        %v1002 = vld [vmem:[%s2 + $0x14] sm:$0xf]
        %v1003 = vld [vmem:[%s2 + $0x18] sm:$0xf]
        %v1004 = vld [vmem:[%s2 + $0x1c] sm:$0xf]
        %v1005 = vld [vmem:[%s2 + $0x20] sm:$0xf]
        %v1006 = vld [vmem:[%s2 + $0x24] sm:$0xf]
        %v1007 = vld [vmem:[%s2 + $0x28] sm:$0xf]
        %v1008 = vld [vmem:[%s2 + $0x2c] sm:$0xf]
        %v1009 = vld [vmem:[%s2 + $0x30] sm:$0xf]
        %v1010 = vld [vmem:[%s2 + $0x34] sm:$0xf]
        %v1011 = vld [vmem:[%s2 + $0x38] sm:$0xf]
        %v1012 = vld [vmem:[%s2 + $0x3c] sm:$0xf]
        %v1013 = vld [vmem:[%s2 + $0x40] sm:$0xf]
        %v1014 = vld [vmem:[%s2 + $0x44] sm:$0xf]
        %v1015 = vld [vmem:[%s2 + $0x48] sm:$0xf]
        %v1016 = vld [vmem:[%s2 + $0x4c] sm:$0xf]
        %v1017 = vld [vmem:[%s2 + $0x50] sm:$0xf]
        %v1018 = vld [vmem:[%s2 + $0x54] sm:$0xf]
        %v1019 = vld [vmem:[%s2 + $0x58] sm:$0xf]
        %v1020 = vld [vmem:[%s2 + $0x5c] sm:$0xf]
        %v1021 = vld [vmem:[%s2 + $0x60] sm:$0xf]
        %v1022 = vld [vmem:[%s2 + $0x64] sm:$0xf]
        %v1023 = vld [vmem:[%s2 + $0x68] sm:$0xf]
        %v1024 = vld [vmem:[%s2 + $0x6c] sm:$0xf]
        %v1025 = vld [vmem:[%s2 + $0x70] sm:$0xf]
        %v1026 = vld [vmem:[%s2 + $0x74] sm:$0xf]
        %v1027 = vld [vmem:[%s2 + $0x78] sm:$0xf]
        %v1028 = vld [vmem:[%s2 + $0x7c] sm:$0xf]
        %v1029 = vld [vmem:[%s2 + $0x80] sm:$0xf]
        %v1030 = vld [vmem:[%s2 + $0x84] sm:$0xf]
        %v1031 = vld [vmem:[%s2 + $0x88] sm:$0xf]
        %v1032 = vld [vmem:[%s2 + $0x8c] sm:$0xf]
        %v1033 = vld [vmem:[%s2 + $0x90] sm:$0xf]
        %v1034 = vld [vmem:[%s2 + $0x94] sm:$0xf]
        %v1035 = vld [vmem:[%s2 + $0x98] sm:$0xf]
        %v1036 = vld [vmem:[%s2 + $0x9c] sm:$0xf]
        %v1037 = vld [vmem:[%s2 + $0xa0] sm:$0xf]
        %v1038 = vld [vmem:[%s2 + $0xa4] sm:$0xf]
        %v1039 = vld [vmem:[%s2 + $0xa8] sm:$0xf]
        %v1040 = vld [vmem:[%s2 + $0xac] sm:$0xf]
        %v1041 = vld [vmem:[%s2 + $0xb0] sm:$0xf]
        %v1042 = vld [vmem:[%s2 + $0xb4] sm:$0xf]
        %v1043 = vld [vmem:[%s2 + $0xb8] sm:$0xf]
        %v1044 = vld [vmem:[%s2 + $0xbc] sm:$0xf]
        %v1045 = vld [vmem:[%s2 + $0xc0] sm:$0xf]
        %v1046 = vld [vmem:[%s2 + $0xc4] sm:$0xf]
        %v1047 = vld [vmem:[%s2 + $0xc8] sm:$0xf]
        %v1048 = vld [vmem:[%s2 + $0xcc] sm:$0xf]
        %v1049 = vld [vmem:[%s2 + $0xd0] sm:$0xf]
        %v1050 = vld [vmem:[%s2 + $0xd4] sm:$0xf]
        %v1051 = vld [vmem:[%s2 + $0xd8] sm:$0xf]
        %v1052 = vld [vmem:[%s2 + $0xdc] sm:$0xf]
        %v1053 = vld [vmem:[%s2 + $0xe0] sm:$0xf]
        %v1054 = vld [vmem:[%s2 + $0xe4] sm:$0xf]
        %v1055 = vld [vmem:[%s2 + $0xe8] sm:$0xf]
        %v1056 = vld [vmem:[%s2 + $0xec] sm:$0xf]
        %v1057 = vld [vmem:[%s2 + $0xf0] sm:$0xf]
        %v1058 = vld [vmem:[%s2 + $0xf4] sm:$0xf]
        %v1059 = vld [vmem:[%s2 + $0xf8] sm:$0xf]
        %v1060 = vld [vmem:[%s2 + $0xfc] sm:$0xf]
        %v1061 = vlaneseq
        %v1062 = vshrl.u32 %v1061, 7
        %v1063 = vsub.s32 0, %v1062
        %v1064 = vrot.slane %v262, %v1063
        %v1129 = vunpack.c.l.b16 %v997
        %v1130 = vunpack.c.l.b16 %v998
        %v1131 = vunpack.c.l.b16 %v999
        %v1132 = vunpack.c.l.b16 %v1000
        %v1133 = vunpack.c.l.b16 %v1001
        %v1134 = vunpack.c.l.b16 %v1002
        %v1135 = vunpack.c.l.b16 %v1003
        %v1136 = vunpack.c.l.b16 %v1004
        %v1137 = vunpack.c.l.b16 %v1005
        %v1138 = vunpack.c.l.b16 %v1006
        %v1139 = vunpack.c.l.b16 %v1007
        %v1140 = vunpack.c.l.b16 %v1008
        %v1141 = vunpack.c.l.b16 %v1009
        %v1142 = vunpack.c.l.b16 %v1010
        %v1143 = vunpack.c.l.b16 %v1011
        %v1144 = vunpack.c.l.b16 %v1012
        %v1145 = vunpack.c.l.b16 %v1013
        %v1146 = vunpack.c.l.b16 %v1014
        %v1147 = vunpack.c.l.b16 %v1015
        %v1148 = vunpack.c.l.b16 %v1016
        %v1149 = vunpack.c.l.b16 %v1017
        %v1150 = vunpack.c.l.b16 %v1018
        %v1151 = vunpack.c.l.b16 %v1019
        %v1152 = vunpack.c.l.b16 %v1020
        %v1153 = vunpack.c.l.b16 %v1021
        %v1154 = vunpack.c.l.b16 %v1022
        %v1155 = vunpack.c.l.b16 %v1023
        %v1156 = vunpack.c.l.b16 %v1024
        %v1157 = vunpack.c.l.b16 %v1025
        %v1158 = vunpack.c.l.b16 %v1026
        %v1159 = vunpack.c.l.b16 %v1027
        %v1160 = vunpack.c.l.b16 %v1028
        %v1161 = vunpack.c.l.b16 %v1029
        %v1162 = vunpack.c.l.b16 %v1030
        %v1163 = vunpack.c.l.b16 %v1031
        %v1164 = vunpack.c.l.b16 %v1032
        %v1165 = vunpack.c.l.b16 %v1033
        %v1166 = vunpack.c.l.b16 %v1034
        %v1167 = vunpack.c.l.b16 %v1035
        %v1168 = vunpack.c.l.b16 %v1036
        %v1169 = vunpack.c.l.b16 %v1037
        %v1170 = vunpack.c.l.b16 %v1038
        %v1171 = vunpack.c.l.b16 %v1039
        %v1172 = vunpack.c.l.b16 %v1040
        %v1173 = vunpack.c.l.b16 %v1041
        %v1174 = vunpack.c.l.b16 %v1042
        %v1175 = vunpack.c.l.b16 %v1043
        %v1176 = vunpack.c.l.b16 %v1044
        %v1177 = vunpack.c.l.b16 %v1045
        %v1178 = vunpack.c.l.b16 %v1046
        %v1179 = vunpack.c.l.b16 %v1047
        %v1180 = vunpack.c.l.b16 %v1048
        %v1181 = vunpack.c.l.b16 %v1049
        %v1182 = vunpack.c.l.b16 %v1050
        %v1183 = vunpack.c.l.b16 %v1051
        %v1184 = vunpack.c.l.b16 %v1052
        %v1185 = vunpack.c.l.b16 %v1053
        %v1186 = vunpack.c.l.b16 %v1054
        %v1187 = vunpack.c.l.b16 %v1055
        %v1188 = vunpack.c.l.b16 %v1056
        %v1189 = vunpack.c.l.b16 %v1057
        %v1190 = vunpack.c.l.b16 %v1058
        %v1191 = vunpack.c.l.b16 %v1059
        %v1192 = vunpack.c.l.b16 %v1060
        %v1193 = vpack.c.b16 %v1130, %v1129
        %v1194 = vpack.c.b16 %v1132, %v1131
        %v1195 = vpack.c.b16 %v1134, %v1133
        %v1196 = vpack.c.b16 %v1136, %v1135
        %v1197 = vpack.c.b16 %v1138, %v1137
        %v1198 = vpack.c.b16 %v1140, %v1139
        %v1199 = vpack.c.b16 %v1142, %v1141
        %v1200 = vpack.c.b16 %v1144, %v1143
        %v1201 = vpack.c.b16 %v1146, %v1145
        %v1202 = vpack.c.b16 %v1148, %v1147
        %v1203 = vpack.c.b16 %v1150, %v1149
        %v1204 = vpack.c.b16 %v1152, %v1151
        %v1205 = vpack.c.b16 %v1154, %v1153
        %v1206 = vpack.c.b16 %v1156, %v1155
        %v1207 = vpack.c.b16 %v1158, %v1157
        %v1208 = vpack.c.b16 %v1160, %v1159
        %v1209 = vpack.c.b16 %v1162, %v1161
        %v1210 = vpack.c.b16 %v1164, %v1163
        %v1211 = vpack.c.b16 %v1166, %v1165
        %v1212 = vpack.c.b16 %v1168, %v1167
        %v1213 = vpack.c.b16 %v1170, %v1169
        %v1214 = vpack.c.b16 %v1172, %v1171
        %v1215 = vpack.c.b16 %v1174, %v1173
        %v1216 = vpack.c.b16 %v1176, %v1175
        %v1217 = vpack.c.b16 %v1178, %v1177
        %v1218 = vpack.c.b16 %v1180, %v1179
        %v1219 = vpack.c.b16 %v1182, %v1181
        %v1220 = vpack.c.b16 %v1184, %v1183
        %v1221 = vpack.c.b16 %v1186, %v1185
        %v1222 = vpack.c.b16 %v1188, %v1187
        %v1223 = vpack.c.b16 %v1190, %v1189
        %v1224 = vpack.c.b16 %v1192, %v1191
        %1257 = vmatprep.subr.bf16.mxu0 0
        %1258 = vmatpush1.bf16.msra.mxu0 %v1193
        %1259 = vmatprep.subr.bf16.mxu0 0
        %1260 = vmatpush1.bf16.msra.mxu0 %v1194
        %1261 = vmatprep.subr.bf16.mxu0 0
        %1262 = vmatpush1.bf16.msra.mxu0 %v1195
        %1263 = vmatprep.subr.bf16.mxu0 0
        %1264 = vmatpush1.bf16.msra.mxu0 %v1196
        %1265 = vmatprep.subr.bf16.mxu0 0
        %1266 = vmatpush1.bf16.msra.mxu0 %v1197
        %1267 = vmatprep.subr.bf16.mxu0 0
        %1268 = vmatpush1.bf16.msra.mxu0 %v1198
        %1269 = vmatprep.subr.bf16.mxu0 0
        %1270 = vmatpush1.bf16.msra.mxu0 %v1199
        %1271 = vmatprep.subr.bf16.mxu0 0
        %1272 = vmatpush1.bf16.msra.mxu0 %v1200
        %1273 = vmatprep.subr.bf16.mxu0 0
        %1274 = vmatpush1.bf16.msra.mxu0 %v1201
        %1275 = vmatprep.subr.bf16.mxu0 0
        %1276 = vmatpush1.bf16.msra.mxu0 %v1202
        %1277 = vmatprep.subr.bf16.mxu0 0
        %1278 = vmatpush1.bf16.msra.mxu0 %v1203
        %1279 = vmatprep.subr.bf16.mxu0 0
        %1280 = vmatpush1.bf16.msra.mxu0 %v1204
        %1281 = vmatprep.subr.bf16.mxu0 0
        %1282 = vmatpush1.bf16.msra.mxu0 %v1205
        %1283 = vmatprep.subr.bf16.mxu0 0
        %1284 = vmatpush1.bf16.msra.mxu0 %v1206
        %1285 = vmatprep.subr.bf16.mxu0 0
        %1286 = vmatpush1.bf16.msra.mxu0 %v1207
        %1287 = vmatprep.subr.bf16.mxu0 0
        %1288 = vmatpush1.bf16.msra.mxu0 %v1208
        %1289 = vmatprep.mubr.bf16.mxu0 %v994
        %1290 = vmatmul.mubr.bf16.gmra.mrb[0].mxu0 %v993
        %v1291 = vpop.f32.mrb[0].mxu0
        %v1292 = vadd.f32 %v1064, %v1291
        %v1293 = vpop.f32.mrb[0].mxu0
        %v1294 = vpop.f32.mrb[0].mxu0
        %v1295 = vpop.f32.mrb[0].mxu0
        %1296 = vdwg.mxu0
        %1297 = vmatprep.subr.bf16.mxu0 0
        %1298 = vmatpush1.bf16.msra.mxu0 %v1209
        %1299 = vmatprep.subr.bf16.mxu0 0
        %1300 = vmatpush1.bf16.msra.mxu0 %v1210
        %1301 = vmatprep.subr.bf16.mxu0 0
        %1302 = vmatpush1.bf16.msra.mxu0 %v1211
        %1303 = vmatprep.subr.bf16.mxu0 0
        %1304 = vmatpush1.bf16.msra.mxu0 %v1212
        %1305 = vmatprep.subr.bf16.mxu0 0
        %1306 = vmatpush1.bf16.msra.mxu0 %v1213
        %1307 = vmatprep.subr.bf16.mxu0 0
        %1308 = vmatpush1.bf16.msra.mxu0 %v1214
        %1309 = vmatprep.subr.bf16.mxu0 0
        %1310 = vmatpush1.bf16.msra.mxu0 %v1215
        %1311 = vmatprep.subr.bf16.mxu0 0
        %1312 = vmatpush1.bf16.msra.mxu0 %v1216
        %1313 = vmatprep.subr.bf16.mxu0 0
        %1314 = vmatpush1.bf16.msra.mxu0 %v1217
        %1315 = vmatprep.subr.bf16.mxu0 0
        %1316 = vmatpush1.bf16.msra.mxu0 %v1218
        %1317 = vmatprep.subr.bf16.mxu0 0
        %1318 = vmatpush1.bf16.msra.mxu0 %v1219
        %1319 = vmatprep.subr.bf16.mxu0 0
        %1320 = vmatpush1.bf16.msra.mxu0 %v1220
        %1321 = vmatprep.subr.bf16.mxu0 0
        %1322 = vmatpush1.bf16.msra.mxu0 %v1221
        %1323 = vmatprep.subr.bf16.mxu0 0
        %1324 = vmatpush1.bf16.msra.mxu0 %v1222
        %1325 = vmatprep.subr.bf16.mxu0 0
        %1326 = vmatpush1.bf16.msra.mxu0 %v1223
        %1327 = vmatprep.subr.bf16.mxu0 0
        %1328 = vmatpush1.bf16.msra.mxu0 %v1224
        %1329 = vmatprep.mubr.bf16.mxu0 %v996
        %1330 = vmatmul.mubr.bf16.gmra.mrb[0].mxu0 %v995
        %v1331 = vpop.f32.mrb[0].mxu0
        %v1332 = vadd.f32 %v1292, %v1331
        %v1333 = vpop.f32.mrb[0].mxu0
        %v1334 = vpop.f32.mrb[0].mxu0
        %v1335 = vpop.f32.mrb[0].mxu0
        %1336 = vdwg.mxu0
        %vm1337 = vcmp.ge.f32.partialorder %v1332, 0.0
        %v1338 = vmul.f32 %v1332, 0.2
        %v1339 = vsel %vm1337, %v1332, %v1338
        %v1340 = vlaneseq
        %v1341 = vshrl.u32 %v1340, 7
        %v1342 = vsub.s32 0, %v1341
        %v1343 = vrot.slane %v263, %v1342
        %v1344 = vmul.f32 %v1339, %v1343
        %vm1345 = vcmask 519168
        %v1346 = vsel %vm1345, %v1344, 0.0
        %1347 = vadd.xlane.f32.xlu0 %v1346
        %v1348 = vpop.xlane.xlu0 %1347
        %v1349 = vlaneseq
        %v1350 = vshrl.u32 %v1349, 7
        %v1351 = vsub.s32 0, %v1350
        %v1352 = vrot.slane %v264, %v1351
        %v1353 = vadd.f32 %v1348, %v1352
        %1354 = vst.msk [vmem:[%s258] sm:$0xf] %vm1345, %v1339
        %1356 = vrot.lane.b32.xlu0 %v1353, 64
        %v1357 = vpop.permute.xlu0 %1356
        %vm1359 = vcmask 527872
        %1360 = vst.msk [vmem:[%s258] sm:$0xf] %vm1359, %v1357
        %p1361 = scmp.lt.s32.totalorder %s15, 3
        %s1362 = scalar_select %p1361, %s15, 3
        %s1363 = smul.addr %s1362, 8
        %s1364 = scalar_lea.vmem %s4, %s1363
        // Predicated region
        $region75: #{discriminator_forward.1} parent=69 // pred_check
          %p1365 = pneg %p122
        $region76: #{discriminator_forward.1} parent=69 // pred_check_branch
          %1367 = sbr.rel (%p1365) target = $region78
        $region77: #{discriminator_forward.1} parent=69 // pred_region
          _
        $region78: #{discriminator_forward.1} parent=69 // pred_fallthru
          _
      $region70: #{discriminator_forward.1} parent=5 // pred_fallthru
        _
      %p1368 = scmp.le.s32.totalorder 2, %s10
      // Predicated region
      $region79: #{discriminator_forward.1} parent=5 // pred_check
        %p1369 = pneg %p1368
      $region80: #{discriminator_forward.1} parent=5 // pred_check_branch
        %1371 = sbr.rel (%p1369) target = $region82
      $region81: #{discriminator_forward.1} parent=5 // pred_region
        %s1372 = ssub.s32 %s10, 2
        // Predicated region
        $region83: #{discriminator_forward.1} parent=81 // pred_check
          %p1373 = pneg %p128
        $region84: #{discriminator_forward.1} parent=81 // pred_check_branch
          %1375 = sbr.rel (%p1373) target = $region86
        $region85: #{discriminator_forward.1} parent=81 // pred_region
          %p1376 = scmp.lt.s32.totalorder %s16, 3
          %s1377 = scalar_select %p1376, %s16, 3
          %s1378 = smul.addr %s1377, 8
          %s1379 = scalar_lea.vmem %s4, %s1378
        $region86: #{discriminator_forward.1} parent=81 // pred_fallthru
          _
      $region82: #{discriminator_forward.1} parent=5 // pred_fallthru
        _
    $region6: #{discriminator_forward.1} parent=1 // loop_footer
      %s14 = sadd.s32 1, %s10
    $region7: #{discriminator_forward.1} parent=1 // loop_footer_branch
      %9 = sbr.rel target = $region3
    $region8: #{discriminator_forward.1} parent=1 // loop_exit
      _

</llo_original>
